<compile_context>
chip_gen: v7x
topology: tpu7x:2x2x1
jax: 0.10.0
libtpu: 0.0.40
codegen_flags: <defaults>
</compile_context>

<pallas_src>
import functools

import jax
import jax.numpy as jnp
from jax.experimental import pallas as pl
from jax.experimental.pallas import tpu as pltpu


# ----------------------------- helpers -----------------------------

def _round_up(x, m):
    return ((x + m - 1) // m) * m


def _largest_divisor_tile(dim, unit, cap):
    """Largest multiple of `unit` that divides `dim` and is <= cap (assumes dim % unit == 0)."""
    best = unit
    t = unit
    while t <= min(dim, cap):
        if dim % t == 0:
            best = t
        t += unit
    return best


def _vmem_footprint_bytes(tm, th, C):
    dbl = lambda b: 2 * b              # BlockSpec double buffering
    return (dbl(tm * C * 2)            # x tile (bf16)
            + dbl(tm * 4)              # gate tile (f32)
            + dbl(C * th * 2)          # W1 block (bf16)
            + dbl(th * 4)              # b1 block (f32)
            + dbl(th * C * 2)          # W2 block (bf16)
            + dbl(C * 4)               # b2 block (f32)
            + dbl(tm * C * 4)          # output tile (f32)
            + tm * C * 4)              # f32 accumulator scratch


def _choose_tiles(M, C, H, E):
    """Row tile (expanded token axis) and hidden tile, sized to a VMEM budget that is safe on
    all generations (v7x has only 64 MiB of VMEM)."""
    tm = max(8, min(512, _round_up(max(M // max(E, 1), 1), 8)))
    th = _largest_divisor_tile(H, 128, 1024)
    budget = 40 * 1024 * 1024
    while _vmem_footprint_bytes(tm, th, C) > budget and th > 128:
        th = _largest_divisor_tile(H, 128, th // 2)
    while _vmem_footprint_bytes(tm, th, C) > budget and tm > 8:
        tm = max(8, _round_up(tm // 2, 8))
    return tm, th


# ----------------------------- kernels -----------------------------

def _router_kernel(x_ref, noise_ref, wr_ref, br_ref, wn_ref, bn_ref, noisy_ref):
    x = x_ref[...]                                                        # (tr, C) f32
    logits = jnp.dot(x, wr_ref[...], preferred_element_type=jnp.float32) + br_ref[...]
    nlog = jnp.dot(x, wn_ref[...], preferred_element_type=jnp.float32) + bn_ref[...]
    # numerically-stable softplus
    sp = jnp.maximum(nlog, 0.0) + jnp.log(1.0 + jnp.exp(-jnp.abs(nlog)))
    noisy_ref[...] = logits + noise_ref[...] * sp                         # (tr, E)


def _grouped_expert_kernel(te_ref, x_ref, g_ref, w1_ref, b1_ref, w2_ref, b2_ref,
                           o_ref, acc_ref):
    # grid = (row_tiles, H // tH); each row tile belongs to exactly one expert (te_ref[i]),
    # already used by the index_maps to stream only that expert's weight blocks.
    del te_ref
    h_idx = pl.program_id(1)

    @pl.when(h_idx == 0)
    def _():
        acc_ref[...] = jnp.zeros_like(acc_ref)

    # First matmul: full contraction over C per tH slice; x is pre-cast bf16 (hoisted cast).
    h = jnp.dot(x_ref[...], w1_ref[...], preferred_element_type=jnp.float32) + b1_ref[...]
    h = jnp.maximum(h, 0.0).astype(jnp.bfloat16)        # bf16 intermediate (re-cast anyway)
    # Second matmul accumulated across tH tiles (v7x MRB-friendly accumulate form).
    acc_ref[...] += jnp.dot(h, w2_ref[...], preferred_element_type=jnp.float32)

    @pl.when(h_idx == pl.num_programs(1) - 1)
    def _():
        o_ref[...] = (g_ref[...] * (acc_ref[...] + b2_ref[...])).astype(o_ref.dtype)


# ----------------------------- pallas_call wrappers -----------------------------

def _router_noisy_logits(xf, noise_f, params):
    N, C = xf.shape
    E = params["w_route"].shape[1]
    n_pad = _round_up(N, 8) if N <= 512 else _round_up(N, 512)
    tr = min(512, n_pad)
    if n_pad != N:
        xf = jnp.pad(xf, ((0, n_pad - N), (0, 0)))
        noise_f = jnp.pad(noise_f, ((0, n_pad - N), (0, 0)))

    noisy = pl.pallas_call(
        _router_kernel,
        out_shape=jax.ShapeDtypeStruct((n_pad, E), jnp.float32),
        grid_spec=pltpu.PrefetchScalarGridSpec(
            num_scalar_prefetch=0,
            grid=(n_pad // tr,),
            in_specs=[
                pl.BlockSpec((tr, C), lambda i: (i, 0)),     # x tokens
                pl.BlockSpec((tr, E), lambda i: (i, 0)),     # router noise
                pl.BlockSpec((C, E), lambda i: (0, 0)),      # W_route
                pl.BlockSpec((1, E), lambda i: (0, 0)),      # b_route
                pl.BlockSpec((C, E), lambda i: (0, 0)),      # W_noise
                pl.BlockSpec((1, E), lambda i: (0, 0)),      # b_noise
            ],
            out_specs=pl.BlockSpec((tr, E), lambda i: (i, 0)),
        ),
        compiler_params=pltpu.CompilerParams(dimension_semantics=("parallel",)),
    )(xf, noise_f, params["w_route"], params["b_route"],
      params["w_noise"], params["b_noise"])
    return noisy[:N]


def _grouped_experts(tile_experts, x_sorted, gates_pad, params, *, tm, th):
    M_pad, C = x_sorted.shape
    E, _, H = params["w1"].shape
    n_row_tiles = M_pad // tm
    n_h = H // th

    vmem_limit = int(min(100 * 2**20,
                         max(32 * 2**20,
                             _vmem_footprint_bytes(tm, th, C) * 5 // 4 + 2 * 2**20)))

    return pl.pallas_call(
        _grouped_expert_kernel,
        out_shape=jax.ShapeDtypeStruct((M_pad, C), jnp.float32),
        grid_spec=pltpu.PrefetchScalarGridSpec(
            num_scalar_prefetch=1,                                    # per-tile expert schedule
            grid=(n_row_tiles, n_h),
            in_specs=[
                pl.BlockSpec((tm, C), lambda i, h, te: (i, 0)),                       # x_sorted (bf16)
                pl.BlockSpec((tm, 1), lambda i, h, te: (i, 0)),                       # gate per row
                pl.BlockSpec((pl.Squeezed(), C, th), lambda i, h, te: (te[i], 0, h)),  # W1[e] block
                pl.BlockSpec((pl.Squeezed(), 1, th), lambda i, h, te: (te[i], 0, h)),  # b1[e] block
                pl.BlockSpec((pl.Squeezed(), th, C), lambda i, h, te: (te[i], h, 0)),  # W2[e] block
                pl.BlockSpec((pl.Squeezed(), 1, C), lambda i, h, te: (te[i], 0, 0)),   # b2[e]
            ],
            out_specs=pl.BlockSpec((tm, C), lambda i, h, te: (i, 0)),
            scratch_shapes=[pltpu.VMEM((tm, C), jnp.float32)],        # f32 accumulator
        ),
        compiler_params=pltpu.CompilerParams(
            dimension_semantics=("parallel", "arbitrary"),
            vmem_limit_bytes=vmem_limit,
        ),
    )(tile_experts, x_sorted, gates_pad,
      params["w1"], params["b1"], params["w2"], params["b2"])


# ----------------------------- forward -----------------------------

def prepare_moe_params(w_route, b_route, w_noise, b_noise, w1, b1, w2, b2):
    """One-time weight preparation (kept OUT of the per-call forward path):
    bf16 pre-cast of expert weights (MXU operands, half the HBM streaming) + bias reshapes."""
    E, C, H = w1.shape
    return dict(
        w_route=w_route.astype(jnp.float32),
        b_route=b_route.reshape(1, E).astype(jnp.float32),
        w_noise=w_noise.astype(jnp.float32),
        b_noise=b_noise.reshape(1, E).astype(jnp.float32),
        w1=w1.astype(jnp.bfloat16),                       # (E, C, H)
        b1=b1.reshape(E, 1, H).astype(jnp.float32),
        w2=w2.astype(jnp.bfloat16),                       # (E, H, C)
        b2=b2.reshape(E, 1, C).astype(jnp.float32),
    )


def moe_forward(params, x, noise, *, top_k):
    """x: (B,T,C) f32; noise: (B,T,E) standard-normal samples. Returns (B,T,C)."""
    B, T, C = x.shape
    E, _, H = params["w1"].shape
    assert C % 128 == 0 and H % 128 == 0, "n_embd and hidden must be multiples of 128"
    N = B * T
    K = top_k

    xf = x.reshape(N, C).astype(jnp.float32)
    noise_f = noise.reshape(N, E).astype(jnp.float32)

    # ---- Router (Pallas): noisy top-k logits ----
    noisy = _router_noisy_logits(xf, noise_f, params)                      # (N, E) f32

    # ---- Top-k + gates (tiny XLA glue). softmax over the k kept logits is exactly the
    #      softmax of the -inf-sparsified logits used by the PyTorch module. ----
    topv, topi = jax.lax.top_k(noisy, K)                                   # (N, K)
    gates_k = jax.nn.softmax(topv, axis=-1).astype(jnp.float32)            # (N, K)

    # ---- Group (token, expert) pairs by expert; pad each group to a row tile ----
    M = N * K
    tm, th = _choose_tiles(M, C, H, E)

    expert_flat = topi.reshape(-1).astype(jnp.int32)                       # (M,)
    token_flat = jnp.repeat(jnp.arange(N, dtype=jnp.int32), K)             # (M,)
    gate_flat = gates_k.reshape(-1)

    order = jnp.argsort(expert_flat)                                       # stable
    expert_sorted = expert_flat[order]
    token_sorted = token_flat[order]
    gate_sorted = gate_flat[order]

    group_sizes = jnp.bincount(expert_flat, length=E).astype(jnp.int32)    # (E,)
    group_starts = jnp.concatenate(
        [jnp.zeros((1,), jnp.int32), jnp.cumsum(group_sizes).astype(jnp.int32)])[:E]
    padded_sizes = ((group_sizes + tm - 1) // tm) * tm
    padded_offsets = jnp.concatenate(
        [jnp.zeros((1,), jnp.int32), jnp.cumsum(padded_sizes).astype(jnp.int32)])   # (E+1,)

    M_pad = _round_up(M, tm) + E * tm              # static upper bound on padded rows
    n_row_tiles = M_pad // tm

    rank = jnp.arange(M, dtype=jnp.int32) - group_starts[expert_sorted]
    dest_row = padded_offsets[expert_sorted] + rank                        # (M,), unique

    src_token = jnp.zeros((M_pad,), jnp.int32).at[dest_row].set(token_sorted)
    gates_pad = jnp.zeros((M_pad, 1), jnp.float32).at[dest_row, 0].set(gate_sorted)

    tile_starts = jnp.arange(n_row_tiles, dtype=jnp.int32) * tm
    tile_experts = jnp.clip(
        jnp.searchsorted(padded_offsets, tile_starts, side="right") - 1, 0, E - 1
    ).astype(jnp.int32)

    # Gather tokens into expert-sorted order; bf16 cast done once here (hoisted out of kernel).
    x_sorted = xf.astype(jnp.bfloat16)[src_token]                          # (M_pad, C)

    # ---- Grouped expert compute (Pallas): only routed rows hit the MXU ----
    y_sorted = _grouped_experts(tile_experts, x_sorted, gates_pad, params, tm=tm, th=th)

    # ---- Scatter-add back to token order (padded rows carry gate 0 -> contribute zeros) ----
    out = jnp.zeros((N, C), jnp.float32).at[src_token].add(y_sorted)
    return out.reshape(B, T, C).astype(x.dtype)


# ----------------------------- pure-JAX reference -----------------------------

def moe_reference(x, w_route, b_route, w_noise, b_noise, w1, b1, w2, b2, noise, *, top_k):
    """Mirrors the PyTorch forward (eval mode); expert matmuls use the same bf16-operand /
    f32-accumulate recipe as the kernel."""
    B, T, C = x.shape
    E = w_route.shape[-1]

    logits = x @ w_route + b_route
    noise_logits = x @ w_noise + b_noise
    sp = jnp.maximum(noise_logits, 0.0) + jnp.log(1.0 + jnp.exp(-jnp.abs(noise_logits)))
    noisy = logits + noise * sp

    topv, topi = jax.lax.top_k(noisy, top_k)
    keep = jnp.sum(jax.nn.one_hot(topi, E, dtype=noisy.dtype), axis=-2) > 0
    sparse = jnp.where(keep, noisy, -jnp.inf)
    gates = jax.nn.softmax(sparse, axis=-1)

    xb = x.reshape(-1, C).astype(jnp.bfloat16)
    gflat = gates.reshape(-1, E)
    out = jnp.zeros((B * T, C), dtype=jnp.float32)
    for e in range(E):
        h = jnp.dot(xb, w1[e].astype(jnp.bfloat16),
                    preferred_element_type=jnp.float32) + b1[e]
        h = jnp.maximum(h, 0.0)
        y = jnp.dot(h.astype(jnp.bfloat16), w2[e].astype(jnp.bfloat16),
                    preferred_element_type=jnp.float32) + b2[e]
        out = out + gflat[:, e:e + 1] * y
    return out.reshape(B, T, C).astype(x.dtype)


if __name__ == "__main__":
    # Small shapes consistent with the module (n_embd scaled down from 4096).
    B, T = 2, 16
    n_embd = 128
    hidden = 4 * n_embd
    num_experts = 8
    top_k = 2

    key = jax.random.PRNGKey(0)
    keys = jax.random.split(key, 10)

    x = jax.random.normal(keys[0], (B, T, n_embd), dtype=jnp.float32)

    def linear_init(kw, kb, fan_in, shape_w, shape_b):
        bound = 1.0 / (fan_in ** 0.5)
        w = jax.random.uniform(kw, shape_w, minval=-bound, maxval=bound, dtype=jnp.float32)
        b = jax.random.uniform(kb, shape_b, minval=-bound, maxval=bound, dtype=jnp.float32)
        return w, b

    w_route, b_route = linear_init(keys[1], keys[2], n_embd,
                                   (n_embd, num_experts), (num_experts,))
    w_noise, b_noise = linear_init(keys[3], keys[4], n_embd,
                                   (n_embd, num_experts), (num_experts,))
    w1, b1 = linear_init(keys[5], keys[6], n_embd,
                         (num_experts, n_embd, hidden), (num_experts, hidden))
    w2, b2 = linear_init(keys[7], keys[8], hidden,
                         (num_experts, hidden, n_embd), (num_experts, n_embd))
    # Stand-in for torch.randn_like(logits): deterministic standard-normal noise input.
    noise = jax.random.normal(keys[9], (B, T, num_experts), dtype=jnp.float32)

    # One-time weight preparation, kept out of the per-call forward path.
    params = prepare_moe_params(w_route, b_route, w_noise, b_noise, w1, b1, w2, b2)

    fwd = jax.jit(functools.partial(moe_forward, top_k=top_k))
    out = jax.block_until_ready(fwd(params, x, noise))

    ref = moe_reference(x, w_route, b_route, w_noise, b_noise, w1, b1, w2, b2, noise,
                        top_k=top_k)

    assert out.shape == (B, T, n_embd)
    max_err = jnp.max(jnp.abs(out - ref))
    assert jnp.allclose(out, ref, atol=1e-2, rtol=1e-2), \
        f"mismatch vs reference, max abs err={max_err}"

    print("KERNEL_OK")
</pallas_src>

<mosaic_0001>
module attributes {stable_mosaic.version = 11 : i64} {
  func.func private @main(%arg0: i32) attributes {dimension_semantics = [#tpu.dimension_semantics<core_parallel>], iteration_bounds = array<i64: 2>, tpu.core_type = #tpu.core_type<sc_scalar_subcore>, window_params = []} {
    return
  }
}

module attributes {stable_mosaic.version = 11 : i64} {
  func.func private @main(%arg0: i32) attributes {dimension_semantics = [#tpu.dimension_semantics<core_parallel>], iteration_bounds = array<i64: 2>, tpu.core_type = #tpu.core_type<sc_scalar_subcore>, window_params = []} {
    return
  }
}

module attributes {stable_mosaic.version = 11 : i64} {
  func.func @_router_kernel(%arg0: i32, %arg1: memref<32x128xf32, #tpu.memory_space<vmem>>, %arg2: memref<32x8xf32, #tpu.memory_space<vmem>>, %arg3: memref<128x8xf32, #tpu.memory_space<vmem>>, %arg4: memref<1x8xf32, #tpu.memory_space<vmem>>, %arg5: memref<128x8xf32, #tpu.memory_space<vmem>>, %arg6: memref<1x8xf32, #tpu.memory_space<vmem>>, %arg7: memref<32x8xf32, #tpu.memory_space<vmem>>) attributes {dimension_semantics = [#tpu.dimension_semantics<parallel>], iteration_bounds = array<i64: 1>, scalar_prefetch = 0 : i64, scratch_operands = 0 : i64, tpu.core_type = #tpu.core_type<tc>, window_params = [{transform_indices = @transform_0, window_bounds = array<i64: 32, 128>}, {transform_indices = @transform_1, window_bounds = array<i64: 32, 8>}, {pipeline_mode = #tpu.pipeline_mode<synchronous>, transform_indices = @transform_2, window_bounds = array<i64: 128, 8>}, {pipeline_mode = #tpu.pipeline_mode<synchronous>, transform_indices = @transform_3, window_bounds = array<i64: 1, 8>}, {pipeline_mode = #tpu.pipeline_mode<synchronous>, transform_indices = @transform_4, window_bounds = array<i64: 128, 8>}, {pipeline_mode = #tpu.pipeline_mode<synchronous>, transform_indices = @transform_5, window_bounds = array<i64: 1, 8>}, {transform_indices = @transform_6, window_bounds = array<i64: 32, 8>}]} {
    %c0 = arith.constant 0 : index
    %c0_0 = arith.constant 0 : index
    %0 = vector.load %arg1[%c0, %c0_0] : memref<32x128xf32, #tpu.memory_space<vmem>>, vector<32x128xf32>
    %c0_1 = arith.constant 0 : index
    %c0_2 = arith.constant 0 : index
    %1 = vector.load %arg3[%c0_1, %c0_2] : memref<128x8xf32, #tpu.memory_space<vmem>>, vector<128x8xf32>
    %cst = arith.constant dense<0.000000e+00> : vector<32x8xf32>
    %2 = tpu.matmul %0, %1, %cst {dimension_numbers = #tpu.dot_dimension_numbers<[1], [0], [0], [1], [0, 0, 1, 1], [], []>} : vector<32x128xf32>, vector<128x8xf32>, vector<32x8xf32> -> vector<32x8xf32>
    %c0_3 = arith.constant 0 : index
    %c0_4 = arith.constant 0 : index
    %3 = vector.load %arg4[%c0_3, %c0_4] : memref<1x8xf32, #tpu.memory_space<vmem>>, vector<1x8xf32>
    %4 = vector.broadcast %3 : vector<1x8xf32> to vector<32x8xf32>
    %5 = arith.addf %2, %4 : vector<32x8xf32>
    %c0_5 = arith.constant 0 : index
    %c0_6 = arith.constant 0 : index
    %6 = vector.load %arg5[%c0_5, %c0_6] : memref<128x8xf32, #tpu.memory_space<vmem>>, vector<128x8xf32>
    %cst_7 = arith.constant dense<0.000000e+00> : vector<32x8xf32>
    %7 = tpu.matmul %0, %6, %cst_7 {dimension_numbers = #tpu.dot_dimension_numbers<[1], [0], [0], [1], [0, 0, 1, 1], [], []>} : vector<32x128xf32>, vector<128x8xf32>, vector<32x8xf32> -> vector<32x8xf32>
    %c0_8 = arith.constant 0 : index
    %c0_9 = arith.constant 0 : index
    %8 = vector.load %arg6[%c0_8, %c0_9] : memref<1x8xf32, #tpu.memory_space<vmem>>, vector<1x8xf32>
    %9 = vector.broadcast %8 : vector<1x8xf32> to vector<32x8xf32>
    %10 = arith.addf %7, %9 : vector<32x8xf32>
    %cst_10 = arith.constant 0.000000e+00 : f32
    %11 = vector.broadcast %cst_10 : f32 to vector<32x8xf32>
    %12 = arith.maximumf %10, %11 : vector<32x8xf32>
    %13 = math.absf %10 : vector<32x8xf32>
    %cst_11 = arith.constant 0.000000e+00 : f32
    %14 = vector.broadcast %cst_11 : f32 to vector<32x8xf32>
    %15 = arith.subf %14, %13 : vector<32x8xf32>
    %16 = math.exp %15 : vector<32x8xf32>
    %cst_12 = arith.constant 1.000000e+00 : f32
    %17 = vector.broadcast %cst_12 : f32 to vector<32x8xf32>
    %18 = arith.addf %17, %16 : vector<32x8xf32>
    %19 = math.log %18 : vector<32x8xf32>
    %20 = arith.addf %12, %19 : vector<32x8xf32>
    %c0_13 = arith.constant 0 : index
    %c0_14 = arith.constant 0 : index
    %21 = vector.load %arg2[%c0_13, %c0_14] : memref<32x8xf32, #tpu.memory_space<vmem>>, vector<32x8xf32>
    %22 = arith.mulf %21, %20 : vector<32x8xf32>
    %23 = arith.addf %5, %22 : vector<32x8xf32>
    %c0_15 = arith.constant 0 : index
    %c0_16 = arith.constant 0 : index
    %24 = vector.load %arg7[%c0_15, %c0_16] : memref<32x8xf32, #tpu.memory_space<vmem>>, vector<32x8xf32>
    tpu.vector_store %arg7[%c0_15, %c0_16], %23 {strides = array<i32>} : memref<32x8xf32, #tpu.memory_space<vmem>>, vector<32x8xf32>,
    return
  }
  func.func @transform_0(%arg0: i32) -> (i32, i32) {
    %c0_i32 = arith.constant 0 : i32
    %c0_i32_0 = arith.constant 0 : i32
    return %arg0, %c0_i32 : i32, i32
  }
  func.func @transform_1(%arg0: i32) -> (i32, i32) {
    %c0_i32 = arith.constant 0 : i32
    %c0_i32_0 = arith.constant 0 : i32
    return %arg0, %c0_i32 : i32, i32
  }
  func.func @transform_2(%arg0: i32) -> (i32, i32) {
    %c0_i32 = arith.constant 0 : i32
    %c0_i32_0 = arith.constant 0 : i32
    %c0_i32_1 = arith.constant 0 : i32
    return %c0_i32, %c0_i32_0 : i32, i32
  }
  func.func @transform_3(%arg0: i32) -> (i32, i32) {
    %c0_i32 = arith.constant 0 : i32
    %c0_i32_0 = arith.constant 0 : i32
    %c0_i32_1 = arith.constant 0 : i32
    return %c0_i32, %c0_i32_0 : i32, i32
  }
  func.func @transform_4(%arg0: i32) -> (i32, i32) {
    %c0_i32 = arith.constant 0 : i32
    %c0_i32_0 = arith.constant 0 : i32
    %c0_i32_1 = arith.constant 0 : i32
    return %c0_i32, %c0_i32_0 : i32, i32
  }
  func.func @transform_5(%arg0: i32) -> (i32, i32) {
    %c0_i32 = arith.constant 0 : i32
    %c0_i32_0 = arith.constant 0 : i32
    %c0_i32_1 = arith.constant 0 : i32
    return %c0_i32, %c0_i32_0 : i32, i32
  }
  func.func @transform_6(%arg0: i32) -> (i32, i32) {
    %c0_i32 = arith.constant 0 : i32
    %c0_i32_0 = arith.constant 0 : i32
    return %arg0, %c0_i32 : i32, i32
  }
}

module attributes {stable_mosaic.version = 11 : i64} {
  func.func @_grouped_expert_kernel(%arg0: i32, %arg1: i32, %arg2: memref<16xi32, #tpu.memory_space<smem>>, %arg3: memref<8x128xbf16, #tpu.memory_space<vmem>>, %arg4: memref<8x1xf32, #tpu.memory_space<vmem>>, %arg5: memref<1x128x512xbf16, #tpu.memory_space<vmem>>, %arg6: memref<1x1x512xf32, #tpu.memory_space<vmem>>, %arg7: memref<1x512x128xbf16, #tpu.memory_space<vmem>>, %arg8: memref<1x1x128xf32, #tpu.memory_space<vmem>>, %arg9: memref<8x128xf32, #tpu.memory_space<vmem>>, %arg10: memref<8x128xf32, #tpu.memory_space<vmem>>) attributes {dimension_semantics = [#tpu.dimension_semantics<parallel>, #tpu.dimension_semantics<arbitrary>], iteration_bounds = array<i64: 16, 1>, scalar_prefetch = 1 : i64, scratch_operands = 1 : i64, tpu.core_type = #tpu.core_type<tc>, window_params = [{transform_indices = @transform_0, window_bounds = array<i64: 8, 128>}, {transform_indices = @transform_1, window_bounds = array<i64: 8, 1>}, {transform_indices = @transform_2, window_bounds = array<i64: 1, 128, 512>}, {transform_indices = @transform_3, window_bounds = array<i64: 1, 1, 512>}, {transform_indices = @transform_4, window_bounds = array<i64: 1, 512, 128>}, {transform_indices = @transform_5, window_bounds = array<i64: 1, 1, 128>}, {transform_indices = @transform_6, window_bounds = array<i64: 8, 128>}]} {
    %c0_i32 = arith.constant 0 : i32
    %0 = arith.cmpi eq, %arg1, %c0_i32 : i32
    %1 = arith.extui %0 : i1 to i32
    %c0_i32_0 = arith.constant 0 : i32
    %2 = arith.cmpi ne, %1, %c0_i32_0 : i32
    scf.if %2 {
      %cst_19 = arith.constant 0.000000e+00 : f32
      %23 = vector.broadcast %cst_19 : f32 to vector<8x128xf32>
      %c0_20 = arith.constant 0 : index
      %c0_21 = arith.constant 0 : index
      %24 = vector.load %arg10[%c0_20, %c0_21] : memref<8x128xf32, #tpu.memory_space<vmem>>, vector<8x128xf32>
      tpu.vector_store %arg10[%c0_20, %c0_21], %23 {strides = array<i32>} : memref<8x128xf32, #tpu.memory_space<vmem>>, vector<8x128xf32>,
    } else {
    }
    %c0 = arith.constant 0 : index
    %c0_1 = arith.constant 0 : index
    %3 = vector.load %arg3[%c0, %c0_1] : memref<8x128xbf16, #tpu.memory_space<vmem>>, vector<8x128xbf16>
    %c0_2 = arith.constant 0 : index
    %c0_3 = arith.constant 0 : index
    %c0_4 = arith.constant 0 : index
    %4 = vector.load %arg5[%c0_2, %c0_3, %c0_4] : memref<1x128x512xbf16, #tpu.memory_space<vmem>>, vector<1x128x512xbf16>
    %5 = vector.shape_cast %4 : vector<1x128x512xbf16> to vector<128x512xbf16>
    %cst = arith.constant dense<0.000000e+00> : vector<8x512xf32>
    %6 = tpu.matmul %3, %5, %cst {dimension_numbers = #tpu.dot_dimension_numbers<[1], [0], [0], [1], [0, 0, 1, 1], [], []>} : vector<8x128xbf16>, vector<128x512xbf16>, vector<8x512xf32> -> vector<8x512xf32>
    %c0_5 = arith.constant 0 : index
    %c0_6 = arith.constant 0 : index
    %c0_7 = arith.constant 0 : index
    %7 = vector.load %arg6[%c0_5, %c0_6, %c0_7] : memref<1x1x512xf32, #tpu.memory_space<vmem>>, vector<1x1x512xf32>
    %8 = vector.shape_cast %7 : vector<1x1x512xf32> to vector<1x512xf32>
    %9 = vector.broadcast %8 : vector<1x512xf32> to vector<8x512xf32>
    %10 = arith.addf %6, %9 : vector<8x512xf32>
    %cst_8 = arith.constant 0.000000e+00 : f32
    %11 = vector.broadcast %cst_8 : f32 to vector<8x512xf32>
    %12 = arith.maximumf %10, %11 : vector<8x512xf32>
    %13 = arith.truncf %12 : vector<8x512xf32> to vector<8x512xbf16>
    %c0_9 = arith.constant 0 : index
    %c0_10 = arith.constant 0 : index
    %14 = vector.load %arg10[%c0_9, %c0_10] : memref<8x128xf32, #tpu.memory_space<vmem>>, vector<8x128xf32>
    %c0_11 = arith.constant 0 : index
    %c0_12 = arith.constant 0 : index
    %c0_13 = arith.constant 0 : index
    %15 = vector.load %arg7[%c0_11, %c0_12, %c0_13] : memref<1x512x128xbf16, #tpu.memory_space<vmem>>, vector<1x512x128xbf16>
    %16 = vector.shape_cast %15 : vector<1x512x128xbf16> to vector<512x128xbf16>
    %cst_14 = arith.constant dense<0.000000e+00> : vector<8x128xf32>
    %17 = tpu.matmul %13, %16, %cst_14 {dimension_numbers = #tpu.dot_dimension_numbers<[1], [0], [0], [1], [0, 0, 1, 1], [], []>} : vector<8x512xbf16>, vector<512x128xbf16>, vector<8x128xf32> -> vector<8x128xf32>
    %18 = arith.addf %14, %17 : vector<8x128xf32>
    %c0_15 = arith.constant 0 : index
    %c0_16 = arith.constant 0 : index
    %19 = vector.load %arg10[%c0_15, %c0_16] : memref<8x128xf32, #tpu.memory_space<vmem>>, vector<8x128xf32>
    tpu.vector_store %arg10[%c0_15, %c0_16], %18 {strides = array<i32>} : memref<8x128xf32, #tpu.memory_space<vmem>>, vector<8x128xf32>,
    %c0_i32_17 = arith.constant 0 : i32
    %20 = arith.cmpi eq, %arg1, %c0_i32_17 : i32
    %21 = arith.extui %20 : i1 to i32
    %c0_i32_18 = arith.constant 0 : i32
    %22 = arith.cmpi ne, %21, %c0_i32_18 : i32
    scf.if %22 {
      %c0_19 = arith.constant 0 : index
      %c0_20 = arith.constant 0 : index
      %23 = vector.load %arg4[%c0_19, %c0_20] : memref<8x1xf32, #tpu.memory_space<vmem>>, vector<8x1xf32>
      %c0_21 = arith.constant 0 : index
      %c0_22 = arith.constant 0 : index
      %24 = vector.load %arg10[%c0_21, %c0_22] : memref<8x128xf32, #tpu.memory_space<vmem>>, vector<8x128xf32>
      %c0_23 = arith.constant 0 : index
      %c0_24 = arith.constant 0 : index
      %c0_25 = arith.constant 0 : index
      %25 = vector.load %arg8[%c0_23, %c0_24, %c0_25] : memref<1x1x128xf32, #tpu.memory_space<vmem>>, vector<1x1x128xf32>
      %26 = vector.shape_cast %25 : vector<1x1x128xf32> to vector<1x128xf32>
      %27 = vector.broadcast %26 : vector<1x128xf32> to vector<8x128xf32>
      %28 = arith.addf %24, %27 : vector<8x128xf32>
      %29 = vector.broadcast %23 : vector<8x1xf32> to vector<8x128xf32>
      %30 = arith.mulf %29, %28 : vector<8x128xf32>
      %c0_26 = arith.constant 0 : index
      %c0_27 = arith.constant 0 : index
      %31 = vector.load %arg9[%c0_26, %c0_27] : memref<8x128xf32, #tpu.memory_space<vmem>>, vector<8x128xf32>
      tpu.vector_store %arg9[%c0_26, %c0_27], %30 {strides = array<i32>} : memref<8x128xf32, #tpu.memory_space<vmem>>, vector<8x128xf32>,
    } else {
    }
    return
  }
  func.func @transform_0(%arg0: i32, %arg1: i32, %arg2: memref<16xi32, #tpu.memory_space<smem>>) -> (i32, i32) {
    %c0_i32 = arith.constant 0 : i32
    %c0_i32_0 = arith.constant 0 : i32
    return %arg0, %c0_i32 : i32, i32
  }
  func.func @transform_1(%arg0: i32, %arg1: i32, %arg2: memref<16xi32, #tpu.memory_space<smem>>) -> (i32, i32) {
    %c0_i32 = arith.constant 0 : i32
    %c0_i32_0 = arith.constant 0 : i32
    return %arg0, %c0_i32 : i32, i32
  }
  func.func @transform_2(%arg0: i32, %arg1: i32, %arg2: memref<16xi32, #tpu.memory_space<smem>>) -> (i32, i32, i32) {
    %0 = arith.index_cast %arg0 : i32 to index
    %1 = memref.load %arg2[%0] : memref<16xi32, #tpu.memory_space<smem>>
    %c0_i32 = arith.constant 0 : i32
    %c0_i32_0 = arith.constant 0 : i32
    return %1, %c0_i32, %arg1 : i32, i32, i32
  }
  func.func @transform_3(%arg0: i32, %arg1: i32, %arg2: memref<16xi32, #tpu.memory_space<smem>>) -> (i32, i32, i32) {
    %0 = arith.index_cast %arg0 : i32 to index
    %1 = memref.load %arg2[%0] : memref<16xi32, #tpu.memory_space<smem>>
    %c0_i32 = arith.constant 0 : i32
    %c0_i32_0 = arith.constant 0 : i32
    return %1, %c0_i32, %arg1 : i32, i32, i32
  }
  func.func @transform_4(%arg0: i32, %arg1: i32, %arg2: memref<16xi32, #tpu.memory_space<smem>>) -> (i32, i32, i32) {
    %0 = arith.index_cast %arg0 : i32 to index
    %1 = memref.load %arg2[%0] : memref<16xi32, #tpu.memory_space<smem>>
    %c0_i32 = arith.constant 0 : i32
    %c0_i32_0 = arith.constant 0 : i32
    return %1, %arg1, %c0_i32 : i32, i32, i32
  }
  func.func @transform_5(%arg0: i32, %arg1: i32, %arg2: memref<16xi32, #tpu.memory_space<smem>>) -> (i32, i32, i32) {
    %0 = arith.index_cast %arg0 : i32 to index
    %1 = memref.load %arg2[%0] : memref<16xi32, #tpu.memory_space<smem>>
    %c0_i32 = arith.constant 0 : i32
    %c0_i32_0 = arith.constant 0 : i32
    %c0_i32_1 = arith.constant 0 : i32
    return %1, %c0_i32, %c0_i32_0 : i32, i32, i32
  }
  func.func @transform_6(%arg0: i32, %arg1: i32, %arg2: memref<16xi32, #tpu.memory_space<smem>>) -> (i32, i32) {
    %c0_i32 = arith.constant 0 : i32
    %c0_i32_0 = arith.constant 0 : i32
    return %arg0, %c0_i32 : i32, i32
  }
}

</mosaic_0001>

<llo_original>
// kernel: custom-call
$region0: #{custom-call}
  %s0 = inlined_call_operand.vmem [shape: u32[16], index: 0, kind: output, shape index: {}]

// kernel: moe_forward.2
$region0: #{moe_forward.2}
  #allocation0 [shape = 'u32[]', space=smem, size = 0x4, offset = 0x4, fixed_abs, tag = 'smem constant byte address 0x4 - core index']
  #allocation1 [shape = 'u32[144,128]{1,0:T(1,128)}', space=vmem, size = 0x12000, scoped, tag = 'internal scratch']
  %s0 = inlined_call_operand.vmem [shape: f32[32,128], index: 0, kind: input, shape index: {}]
  %s1 = inlined_call_operand.vmem [shape: f32[32,8], index: 1, kind: input, shape index: {}]
  %s2 = inlined_call_operand.vmem [shape: f32[128,8], index: 2, kind: input, shape index: {}]
  %s3 = inlined_call_operand.vmem [shape: f32[1,8], index: 3, kind: input, shape index: {}]
  %s4 = inlined_call_operand.vmem [shape: f32[128,8], index: 4, kind: input, shape index: {}]
  %s5 = inlined_call_operand.vmem [shape: f32[1,8], index: 5, kind: input, shape index: {}]
  %s6 = inlined_call_operand.vmem [shape: f32[32,8], index: 6, kind: output, shape index: {}]
  %s7 = sld [smem:[#allocation0]]
  $region34: #{moe_forward.2} parent=0
    _
  %s9 = ssub.s32 1, %s7
  %s10 = scalar_select 0, %s9, %s7
  // Predicated region
  $region2: #{moe_forward.2} parent=0 // pred_check
    _
  $region3: #{moe_forward.2} parent=0 // pred_check_branch
    %12 = sbr.rel (0) target = $region5
  $region4: #{moe_forward.2} parent=0 // pred_region
    _
  $region5: #{moe_forward.2} parent=0 // pred_fallthru
    _
  // Predicated region
  $region6: #{moe_forward.2} parent=0 // pred_check
    _
  $region7: #{moe_forward.2} parent=0 // pred_check_branch
    %14 = sbr.rel (0) target = $region9
  $region8: #{moe_forward.2} parent=0 // pred_region
    _
  $region9: #{moe_forward.2} parent=0 // pred_fallthru
    _
  // Predicated region
  $region10: #{moe_forward.2} parent=0 // pred_check
    _
  $region11: #{moe_forward.2} parent=0 // pred_check_branch
    %16 = sbr.rel (0) target = $region13
  $region12: #{moe_forward.2} parent=0 // pred_region
    _
  $region13: #{moe_forward.2} parent=0 // pred_fallthru
    _
  // Predicated region
  $region14: #{moe_forward.2} parent=0 // pred_check
    _
  $region15: #{moe_forward.2} parent=0 // pred_check_branch
    %18 = sbr.rel (0) target = $region17
  $region16: #{moe_forward.2} parent=0 // pred_region
    _
  $region17: #{moe_forward.2} parent=0 // pred_fallthru
    _
  // Predicated region
  $region18: #{moe_forward.2} parent=0 // pred_check
    _
  $region19: #{moe_forward.2} parent=0 // pred_check_branch
    %20 = sbr.rel (0) target = $region21
  $region20: #{moe_forward.2} parent=0 // pred_region
    _
  $region21: #{moe_forward.2} parent=0 // pred_fallthru
    _
  // Predicated region
  $region22: #{moe_forward.2} parent=0 // pred_check
    _
  $region23: #{moe_forward.2} parent=0 // pred_check_branch
    %22 = sbr.rel (0) target = $region25
  $region24: #{moe_forward.2} parent=0 // pred_region
    _
  $region25: #{moe_forward.2} parent=0 // pred_fallthru
    _
  %v23 = vld [vmem:[%s0] sm:$0xff]
  %v24 = vld [vmem:[%s0 + $0x8] sm:$0xff]
  %v25 = vld [vmem:[%s0 + $0x10] sm:$0xff]
  %v26 = vld [vmem:[%s0 + $0x18] sm:$0xff]
  %v27 = vld [vmem:[%s2] sm:$0xff]
  %v28 = vld [vmem:[%s2 + $0x8] sm:$0xff]
  %v29 = vld [vmem:[%s2 + $0x10] sm:$0xff]
  %v30 = vld [vmem:[%s2 + $0x18] sm:$0xff]
  %v31 = vld [vmem:[%s2 + $0x20] sm:$0xff]
  %v32 = vld [vmem:[%s2 + $0x28] sm:$0xff]
  %v33 = vld [vmem:[%s2 + $0x30] sm:$0xff]
  %v34 = vld [vmem:[%s2 + $0x38] sm:$0xff]
  %v35 = vld [vmem:[%s2 + $0x40] sm:$0xff]
  %v36 = vld [vmem:[%s2 + $0x48] sm:$0xff]
  %v37 = vld [vmem:[%s2 + $0x50] sm:$0xff]
  %v38 = vld [vmem:[%s2 + $0x58] sm:$0xff]
  %v39 = vld [vmem:[%s2 + $0x60] sm:$0xff]
  %v40 = vld [vmem:[%s2 + $0x68] sm:$0xff]
  %v41 = vld [vmem:[%s2 + $0x70] sm:$0xff]
  %v42 = vld [vmem:[%s2 + $0x78] sm:$0xff]
  %v43 = vld [vmem:[%s3] sm:$0x1]
  %v45 = vlaneseq
  %v46 = vshrl.u32 %v45, 7
  %v47 = vsub.s32 0, %v46
  %v48 = vrot.slane %v43, %v47
  %50 = vmatprep.subr.mxu0 0.0
  %51 = vmatpush1.msra.mxu0 %v27
  %52 = vmatprep.subr.mxu0 0.0
  %53 = vmatpush1.msra.mxu0 %v28
  %54 = vmatprep.subr.mxu0 0.0
  %55 = vmatpush1.msra.mxu0 %v29
  %56 = vmatprep.subr.mxu0 0.0
  %57 = vmatpush1.msra.mxu0 %v30
  %58 = vmatprep.subr.mxu0 0.0
  %59 = vmatpush1.msra.mxu0 %v31
  %60 = vmatprep.subr.mxu0 0.0
  %61 = vmatpush1.msra.mxu0 %v32
  %62 = vmatprep.subr.mxu0 0.0
  %63 = vmatpush1.msra.mxu0 %v33
  %64 = vmatprep.subr.mxu0 0.0
  %65 = vmatpush1.msra.mxu0 %v34
  %66 = vmatprep.subr.mxu0 0.0
  %67 = vmatpush1.msra.mxu0 %v35
  %68 = vmatprep.subr.mxu0 0.0
  %69 = vmatpush1.msra.mxu0 %v36
  %70 = vmatprep.subr.mxu0 0.0
  %71 = vmatpush1.msra.mxu0 %v37
  %72 = vmatprep.subr.mxu0 0.0
  %73 = vmatpush1.msra.mxu0 %v38
  %74 = vmatprep.subr.mxu0 0.0
  %75 = vmatpush1.msra.mxu0 %v39
  %76 = vmatprep.subr.mxu0 0.0
  %77 = vmatpush1.msra.mxu0 %v40
  %78 = vmatprep.subr.mxu0 0.0
  %79 = vmatpush1.msra.mxu0 %v41
  %80 = vmatprep.subr.mxu0 0.0
  %81 = vmatpush1.msra.mxu0 %v42
  %82 = vmatprep.subr.mxu0 0.0
  %83 = vmatpush1.msra.mxu0 0.0
  %84 = vmatprep.subr.mxu0 0.0
  %85 = vmatpush1.msra.mxu0 0.0
  %86 = vmatprep.subr.mxu0 0.0
  %87 = vmatpush1.msra.mxu0 0.0
  %88 = vmatprep.subr.mxu0 0.0
  %89 = vmatpush1.msra.mxu0 0.0
  %90 = vmatprep.subr.mxu0 0.0
  %91 = vmatpush1.msra.mxu0 0.0
  %92 = vmatprep.subr.mxu0 0.0
  %93 = vmatpush1.msra.mxu0 0.0
  %94 = vmatprep.subr.mxu0 0.0
  %95 = vmatpush1.msra.mxu0 0.0
  %96 = vmatprep.subr.mxu0 0.0
  %97 = vmatpush1.msra.mxu0 0.0
  %98 = vmatprep.subr.mxu0 0.0
  %99 = vmatpush1.msra.mxu0 0.0
  %100 = vmatprep.subr.mxu0 0.0
  %101 = vmatpush1.msra.mxu0 0.0
  %102 = vmatprep.subr.mxu0 0.0
  %103 = vmatpush1.msra.mxu0 0.0
  %104 = vmatprep.subr.mxu0 0.0
  %105 = vmatpush1.msra.mxu0 0.0
  %106 = vmatprep.subr.mxu0 0.0
  %107 = vmatpush1.msra.mxu0 0.0
  %108 = vmatprep.subr.mxu0 0.0
  %109 = vmatpush1.msra.mxu0 0.0
  %110 = vmatprep.subr.mxu0 0.0
  %111 = vmatpush1.msra.mxu0 0.0
  %112 = vmatprep.subr.mxu0 0.0
  %113 = vmatpush1.msra.mxu0 0.0
  %114 = vmatprep.mubr.f32.mxu0 0.0
  %115 = vmatmul.mubr.f32.gmra.mrb[0].mxu0 %v23
  %v116 = vpop.f32.mrb[0].mxu0
  %v117 = vadd.f32 %v48, %v116
  %v118 = vpop.f32.mrb[0].mxu0
  %119 = vmatprep.mubr.f32.mxu0 0.0
  %120 = vmatmul.mubr.f32.gmra.mrb[0].mxu0 %v24
  %v121 = vpop.f32.mrb[0].mxu0
  %v122 = vadd.f32 %v48, %v121
  %v123 = vpop.f32.mrb[0].mxu0
  %124 = vmatprep.mubr.f32.mxu0 0.0
  %125 = vmatmul.mubr.f32.gmra.mrb[0].mxu0 %v25
  %v126 = vpop.f32.mrb[0].mxu0
  %v127 = vadd.f32 %v48, %v126
  %v128 = vpop.f32.mrb[0].mxu0
  %129 = vmatprep.mubr.f32.mxu0 0.0
  %130 = vmatmul.mubr.f32.gmra.mrb[0].mxu0 %v26
  %v131 = vpop.f32.mrb[0].mxu0
  %v132 = vadd.f32 %v48, %v131
  %v133 = vpop.f32.mrb[0].mxu0
  %134 = vdwg.mxu0
  %v135 = vld [vmem:[%s4] sm:$0xff]
  %v136 = vld [vmem:[%s4 + $0x8] sm:$0xff]
  %v137 = vld [vmem:[%s4 + $0x10] sm:$0xff]
  %v138 = vld [vmem:[%s4 + $0x18] sm:$0xff]
  %v139 = vld [vmem:[%s4 + $0x20] sm:$0xff]
  %v140 = vld [vmem:[%s4 + $0x28] sm:$0xff]
  %v141 = vld [vmem:[%s4 + $0x30] sm:$0xff]
  %v142 = vld [vmem:[%s4 + $0x38] sm:$0xff]
  %v143 = vld [vmem:[%s4 + $0x40] sm:$0xff]
  %v144 = vld [vmem:[%s4 + $0x48] sm:$0xff]
  %v145 = vld [vmem:[%s4 + $0x50] sm:$0xff]
  %v146 = vld [vmem:[%s4 + $0x58] sm:$0xff]
  %v147 = vld [vmem:[%s4 + $0x60] sm:$0xff]
  %v148 = vld [vmem:[%s4 + $0x68] sm:$0xff]
  %v149 = vld [vmem:[%s4 + $0x70] sm:$0xff]
  %v150 = vld [vmem:[%s4 + $0x78] sm:$0xff]
  %v151 = vld [vmem:[%s5] sm:$0x1]
  %v153 = vlaneseq
  %v154 = vshrl.u32 %v153, 7
  %v155 = vsub.s32 0, %v154
  %v156 = vrot.slane %v151, %v155
  %158 = vmatprep.subr.mxu0 0.0
  %159 = vmatpush1.msra.mxu0 %v135
  %160 = vmatprep.subr.mxu0 0.0
  %161 = vmatpush1.msra.mxu0 %v136
  %162 = vmatprep.subr.mxu0 0.0
  %163 = vmatpush1.msra.mxu0 %v137
  %164 = vmatprep.subr.mxu0 0.0
  %165 = vmatpush1.msra.mxu0 %v138
  %166 = vmatprep.subr.mxu0 0.0
  %167 = vmatpush1.msra.mxu0 %v139
  %168 = vmatprep.subr.mxu0 0.0
  %169 = vmatpush1.msra.mxu0 %v140
  %170 = vmatprep.subr.mxu0 0.0
  %171 = vmatpush1.msra.mxu0 %v141
  %172 = vmatprep.subr.mxu0 0.0
  %173 = vmatpush1.msra.mxu0 %v142
  %174 = vmatprep.subr.mxu0 0.0
  %175 = vmatpush1.msra.mxu0 %v143
  %176 = vmatprep.subr.mxu0 0.0
  %177 = vmatpush1.msra.mxu0 %v144
  %178 = vmatprep.subr.mxu0 0.0
  %179 = vmatpush1.msra.mxu0 %v145
  %180 = vmatprep.subr.mxu0 0.0
  %181 = vmatpush1.msra.mxu0 %v146
  %182 = vmatprep.subr.mxu0 0.0
  %183 = vmatpush1.msra.mxu0 %v147
  %184 = vmatprep.subr.mxu0 0.0
  %185 = vmatpush1.msra.mxu0 %v148
  %186 = vmatprep.subr.mxu0 0.0
  %187 = vmatpush1.msra.mxu0 %v149
  %188 = vmatprep.subr.mxu0 0.0
  %189 = vmatpush1.msra.mxu0 %v150
  %190 = vmatprep.subr.mxu0 0.0
  %191 = vmatpush1.msra.mxu0 0.0
  %192 = vmatprep.subr.mxu0 0.0
  %193 = vmatpush1.msra.mxu0 0.0
  %194 = vmatprep.subr.mxu0 0.0
  %195 = vmatpush1.msra.mxu0 0.0
  %196 = vmatprep.subr.mxu0 0.0
  %197 = vmatpush1.msra.mxu0 0.0
  %198 = vmatprep.subr.mxu0 0.0
  %199 = vmatpush1.msra.mxu0 0.0
  %200 = vmatprep.subr.mxu0 0.0
  %201 = vmatpush1.msra.mxu0 0.0
  %202 = vmatprep.subr.mxu0 0.0
  %203 = vmatpush1.msra.mxu0 0.0
  %204 = vmatprep.subr.mxu0 0.0
  %205 = vmatpush1.msra.mxu0 0.0
  %206 = vmatprep.subr.mxu0 0.0
  %207 = vmatpush1.msra.mxu0 0.0
  %208 = vmatprep.subr.mxu0 0.0
  %209 = vmatpush1.msra.mxu0 0.0
  %210 = vmatprep.subr.mxu0 0.0
  %211 = vmatpush1.msra.mxu0 0.0
  %212 = vmatprep.subr.mxu0 0.0
  %213 = vmatpush1.msra.mxu0 0.0
  %214 = vmatprep.subr.mxu0 0.0
  %215 = vmatpush1.msra.mxu0 0.0
  %216 = vmatprep.subr.mxu0 0.0
  %217 = vmatpush1.msra.mxu0 0.0
  %218 = vmatprep.subr.mxu0 0.0
  %219 = vmatpush1.msra.mxu0 0.0
  %220 = vmatprep.subr.mxu0 0.0
  %221 = vmatpush1.msra.mxu0 0.0
  %222 = vmatprep.mubr.f32.mxu0 0.0
  %223 = vmatmul.mubr.f32.gmra.mrb[0].mxu0 %v23
  %v224 = vpop.f32.mrb[0].mxu0
  %v225 = vadd.f32 %v156, %v224
  %v226 = vpop.f32.mrb[0].mxu0
  %227 = vmatprep.mubr.f32.mxu0 0.0
  %228 = vmatmul.mubr.f32.gmra.mrb[0].mxu0 %v24
  %v229 = vpop.f32.mrb[0].mxu0
  %v230 = vadd.f32 %v156, %v229
  %v231 = vpop.f32.mrb[0].mxu0
  %232 = vmatprep.mubr.f32.mxu0 0.0
  %233 = vmatmul.mubr.f32.gmra.mrb[0].mxu0 %v25
  %v234 = vpop.f32.mrb[0].mxu0
  %v235 = vadd.f32 %v156, %v234
  %v236 = vpop.f32.mrb[0].mxu0
  %237 = vmatprep.mubr.f32.mxu0 0.0
  %238 = vmatmul.mubr.f32.gmra.mrb[0].mxu0 %v26
  %v239 = vpop.f32.mrb[0].mxu0
  %v240 = vadd.f32 %v156, %v239
  %v241 = vpop.f32.mrb[0].mxu0
  %242 = vdwg.mxu0
  %v243 = vmax.f32 %v225, 0.0
  %v244 = vmax.f32 %v230, 0.0
  %v245 = vmax.f32 %v235, 0.0
  %v246 = vmax.f32 %v240, 0.0
  %v247 = vand.u32 2147483647, %v225
  %v248 = vand.u32 2147483647, %v230
  %v249 = vand.u32 2147483647, %v235
  %v250 = vand.u32 2147483647, %v240
  %v251 = vsub.f32 0.0, %v247
  %v252 = vsub.f32 0.0, %v248
  %v253 = vsub.f32 0.0, %v249
  %v254 = vsub.f32 0.0, %v250
  %v255 = vmul.f32 %v251, 1.442695
  %v256 = vpow.pop %v255
  %v257 = vmul.f32 %v252, 1.442695
  %v258 = vpow.pop %v257
  %v259 = vmul.f32 %v253, 1.442695
  %v260 = vpow.pop %v259
  %v261 = vmul.f32 %v254, 1.442695
  %v262 = vpow.pop %v261
  %v263 = vadd.f32 %v256, 1.0
  %v264 = vadd.f32 %v258, 1.0
  %v265 = vadd.f32 %v260, 1.0
  %v266 = vadd.f32 %v262, 1.0
  %v267 = vlog2.pop %v263
  %v268 = vmul.f32 %v267, 0.6931472
  %v269 = vlog2.pop %v264
  %v270 = vmul.f32 %v269, 0.6931472
  %v271 = vlog2.pop %v265
  %v272 = vmul.f32 %v271, 0.6931472
  %v273 = vlog2.pop %v266
  %v274 = vmul.f32 %v273, 0.6931472
  %v275 = vadd.f32 %v243, %v268
  %v276 = vadd.f32 %v244, %v270
  %v277 = vadd.f32 %v245, %v272
  %v278 = vadd.f32 %v246, %v274
  %v279 = vld [vmem:[%s1] sm:$0xff]
  %v280 = vld [vmem:[%s1 + $0x8] sm:$0xff]
  %v281 = vld [vmem:[%s1 + $0x10] sm:$0xff]
  %v282 = vld [vmem:[%s1 + $0x18] sm:$0xff]
  %v283 = vmul.f32 %v279, %v275
  %v284 = vmul.f32 %v280, %v276
  %v285 = vmul.f32 %v281, %v277
  %v286 = vmul.f32 %v282, %v278
  %v287 = vadd.f32 %v117, %v283
  %v288 = vadd.f32 %v122, %v284
  %v289 = vadd.f32 %v127, %v285
  %v290 = vadd.f32 %v132, %v286
  %vm291 = vcmask 64512
  %292 = vst.msk [vmem:[%s6] sm:$0xff] %vm291, %v287
  %293 = vst.msk [vmem:[%s6 + $0x8] sm:$0xff] %vm291, %v288
  %294 = vst.msk [vmem:[%s6 + $0x10] sm:$0xff] %vm291, %v289
  %295 = vst.msk [vmem:[%s6 + $0x18] sm:$0xff] %vm291, %v290
  // Predicated region
  $region26: #{moe_forward.2} parent=0 // pred_check
    _
  $region27: #{moe_forward.2} parent=0 // pred_check_branch
    %297 = sbr.rel (0) target = $region29
  $region28: #{moe_forward.2} parent=0 // pred_region
    _
  $region29: #{moe_forward.2} parent=0 // pred_fallthru
    _
  // Predicated region
  $region30: #{moe_forward.2} parent=0 // pred_check
    _
  $region31: #{moe_forward.2} parent=0 // pred_check_branch
    %299 = sbr.rel (0) target = $region33
  $region32: #{moe_forward.2} parent=0 // pred_region
    _
  $region33: #{moe_forward.2} parent=0 // pred_fallthru
    _

// kernel: moe_forward.3
$region0: #{moe_forward.3}
  #allocation0 [shape = 'u32[]', space=smem, size = 0x4, offset = 0x4, fixed_abs, tag = 'smem constant byte address 0x4 - core index']
  #allocation1 [shape = 'u32[144,128]{1,0:T(1,128)}', space=vmem, size = 0x12000, scoped, tag = 'internal scratch']
  #allocation2 [shape = 'f32[8,128]{1,0:T(8,128)}', space=vmem, size = 0x1000, scoped, tag = 'scratch operand']
  #allocation3 [shape = 's32[1]{0}', space=sflag, size = 0x4, scoped, tag = 'scoped memory for moe_forward.3']
  #allocation4 [shape = 'u8[512]{0}', space=smem, size = 0x200, scoped, tag = 'prefetched SMEM operand 0']
  %s0 = inlined_call_operand.vmem [shape: s32[16], index: 0, kind: input, shape index: {}]
  %s1 = inlined_call_operand.vmem [shape: bf16[128,128], index: 1, kind: input, shape index: {}]
  %s2 = inlined_call_operand.vmem [shape: f32[128,1], index: 2, kind: input, shape index: {}]
  %s3 = inlined_call_operand.vmem [shape: bf16[8,128,512], index: 3, kind: input, shape index: {}]
  %s4 = inlined_call_operand.vmem [shape: f32[8,1,512], index: 4, kind: input, shape index: {}]
  %s5 = inlined_call_operand.vmem [shape: bf16[8,512,128], index: 5, kind: input, shape index: {}]
  %s6 = inlined_call_operand.vmem [shape: f32[8,1,128], index: 6, kind: input, shape index: {}]
  %s7 = inlined_call_operand.vmem [shape: f32[128,128], index: 7, kind: output, shape index: {}]
  %s8 = sld [smem:[#allocation0]]
  $region65: #{moe_forward.3} parent=0
    _
  %s10 = ssub.s32 1, %s8
  %s11 = scalar_select 0, %s10, %s8
  %s12 = sshll.u32 %s0, 4
  %s13 = int_to_ptr.vmem [resolvable:$true] %s12
  %15 = dma.vmem_to_smem %s13, 16, [#allocation4], [#allocation3]
  %16 = dma.done [#allocation3], 16
  %17 = sfence
  loop: start=0, step=1, limit=18
  $region2: #{moe_forward.3} parent=0 // loop_pre_header
    _
  $region3: #{moe_forward.3} parent=0 // loop_header
    %s19 = sphi 0, %s23
    %p20 = scmp.ge.s32.totalorder %s19, 18
    %s26 = sphi 0, %s38
    %s27 = sphi 0, %s34
    %s28 = sphi 0, %s26
    %s29 = sphi 0, %s27
    %s30 = sphi 0, %s28
    %s31 = sphi 0, %s29
    %s41 = sphi 0, %s43
    %s44 = sphi 0, %s41
    %s45 = sphi 0, %s44
    %s61 = sphi 0, %s45
    %s67 = sphi 0, %s69
    %s70 = sphi 0, %s67
    %s71 = sphi 0, %s70
    %s87 = sphi 0, %s71
    %s97 = sphi 0, %s99
    %s100 = sphi 0, %s97
    %s101 = sphi 0, %s100
    %s117 = sphi 0, %s101
    %s127 = sphi 0, %s129
    %s130 = sphi 0, %s127
    %s131 = sphi 0, %s130
    %s147 = sphi 0, %s131
    %s157 = sphi 0, %s159
    %s160 = sphi 0, %s157
    %s161 = sphi 0, %s160
    %s177 = sphi 0, %s161
    %s185 = sphi 0, %s187
    %s188 = sphi 0, %s185
    %s189 = sphi 0, %s188
    %s205 = sphi 0, %s189
    %s211 = sphi 0, %s213
    %s214 = sphi 0, %s211
    %s215 = sphi 0, %s214
    %s231 = sphi 0, %s215
  $region4: #{moe_forward.3} parent=0 // loop_header_branch
    %22 = sbr.rel (%p20) target = $region8
  $region5: #{moe_forward.3} parent=0 // loop_body
    %s24 = ssub.s32 %s19, 1
    %s25 = ssub.s32 %s19, 2
    %s32 = sadd.s32 1, %s27
    %p33 = scmp.ge.s32.totalorder %s32, 1
    %s34 = scalar_select %p33, 0, %s32
    %s35 = sadd.s32 1, %s26
    %s36 = scalar_select %p33, %s35, %s26
    %p37 = scmp.ge.s32.totalorder %s36, 16
    %s38 = scalar_select %p37, 0, %s36
    %s39 = ssub.s32 %s26, %s38
    %p40 = scmp.eq.s32.totalorder %s39, 0
    %s42 = sadd.s32 %s41, 1
    %s43 = scalar_select %p40, %s41, %s42
    %p46 = pneg %p40
    %p47 = scmp.eq.s32.totalorder %s19, 15
    %p48 = por %p46, %p47
    %p49 = scmp.ne.s32.totalorder %s41, %s44
    %p50 = scmp.eq.s32.totalorder %s19, 0
    %p51 = por %p49, %p50
    %p52 = scmp.ne.s32.totalorder %s41, %s44
    %p53 = scmp.eq.s32.totalorder %s24, 15
    %p54 = por %p52, %p53
    %p55 = scmp.ne.s32.totalorder %s44, %s45
    %p56 = scmp.eq.s32.totalorder %s24, 0
    %p57 = por %p55, %p56
    %p58 = scmp.ne.s32.totalorder %s44, %s45
    %p59 = scmp.eq.s32.totalorder %s25, 15
    %p60 = por %p58, %p59
    %p62 = scmp.ne.s32.totalorder %s45, %s61
    %p63 = scmp.eq.s32.totalorder %s25, 0
    %p64 = por %p62, %p63
    %s65 = ssub.s32 %s26, %s38
    %p66 = scmp.eq.s32.totalorder %s65, 0
    %s68 = sadd.s32 %s67, 1
    %s69 = scalar_select %p66, %s67, %s68
    %p72 = pneg %p66
    %p73 = scmp.eq.s32.totalorder %s19, 15
    %p74 = por %p72, %p73
    %p75 = scmp.ne.s32.totalorder %s67, %s70
    %p76 = scmp.eq.s32.totalorder %s19, 0
    %p77 = por %p75, %p76
    %p78 = scmp.ne.s32.totalorder %s67, %s70
    %p79 = scmp.eq.s32.totalorder %s24, 15
    %p80 = por %p78, %p79
    %p81 = scmp.ne.s32.totalorder %s70, %s71
    %p82 = scmp.eq.s32.totalorder %s24, 0
    %p83 = por %p81, %p82
    %p84 = scmp.ne.s32.totalorder %s70, %s71
    %p85 = scmp.eq.s32.totalorder %s25, 15
    %p86 = por %p84, %p85
    %p88 = scmp.ne.s32.totalorder %s71, %s87
    %p89 = scmp.eq.s32.totalorder %s25, 0
    %p90 = por %p88, %p89
    %s91 = sld [smem:[#allocation4 + %s26]]
    %s92 = sld [smem:[#allocation4 + %s38]]
    %s93 = ssub.s32 %s91, %s92
    %s94 = ssub.s32 %s27, %s34
    %s95 = sor.u32 %s93, %s94
    %p96 = scmp.eq.s32.totalorder %s95, 0
    %s98 = sadd.s32 %s97, 1
    %s99 = scalar_select %p96, %s97, %s98
    %p102 = pneg %p96
    %p103 = scmp.eq.s32.totalorder %s19, 15
    %p104 = por %p102, %p103
    %p105 = scmp.ne.s32.totalorder %s97, %s100
    %p106 = scmp.eq.s32.totalorder %s19, 0
    %p107 = por %p105, %p106
    %p108 = scmp.ne.s32.totalorder %s97, %s100
    %p109 = scmp.eq.s32.totalorder %s24, 15
    %p110 = por %p108, %p109
    %p111 = scmp.ne.s32.totalorder %s100, %s101
    %p112 = scmp.eq.s32.totalorder %s24, 0
    %p113 = por %p111, %p112
    %p114 = scmp.ne.s32.totalorder %s100, %s101
    %p115 = scmp.eq.s32.totalorder %s25, 15
    %p116 = por %p114, %p115
    %p118 = scmp.ne.s32.totalorder %s101, %s117
    %p119 = scmp.eq.s32.totalorder %s25, 0
    %p120 = por %p118, %p119
    %s121 = sld [smem:[#allocation4 + %s26]]
    %s122 = sld [smem:[#allocation4 + %s38]]
    %s123 = ssub.s32 %s121, %s122
    %s124 = ssub.s32 %s27, %s34
    %s125 = sor.u32 %s123, %s124
    %p126 = scmp.eq.s32.totalorder %s125, 0
    %s128 = sadd.s32 %s127, 1
    %s129 = scalar_select %p126, %s127, %s128
    %p132 = pneg %p126
    %p133 = scmp.eq.s32.totalorder %s19, 15
    %p134 = por %p132, %p133
    %p135 = scmp.ne.s32.totalorder %s127, %s130
    %p136 = scmp.eq.s32.totalorder %s19, 0
    %p137 = por %p135, %p136
    %p138 = scmp.ne.s32.totalorder %s127, %s130
    %p139 = scmp.eq.s32.totalorder %s24, 15
    %p140 = por %p138, %p139
    %p141 = scmp.ne.s32.totalorder %s130, %s131
    %p142 = scmp.eq.s32.totalorder %s24, 0
    %p143 = por %p141, %p142
    %p144 = scmp.ne.s32.totalorder %s130, %s131
    %p145 = scmp.eq.s32.totalorder %s25, 15
    %p146 = por %p144, %p145
    %p148 = scmp.ne.s32.totalorder %s131, %s147
    %p149 = scmp.eq.s32.totalorder %s25, 0
    %p150 = por %p148, %p149
    %s151 = sld [smem:[#allocation4 + %s26]]
    %s152 = sld [smem:[#allocation4 + %s38]]
    %s153 = ssub.s32 %s151, %s152
    %s154 = ssub.s32 %s27, %s34
    %s155 = sor.u32 %s153, %s154
    %p156 = scmp.eq.s32.totalorder %s155, 0
    %s158 = sadd.s32 %s157, 1
    %s159 = scalar_select %p156, %s157, %s158
    %p162 = pneg %p156
    %p163 = scmp.eq.s32.totalorder %s19, 15
    %p164 = por %p162, %p163
    %p165 = scmp.ne.s32.totalorder %s157, %s160
    %p166 = scmp.eq.s32.totalorder %s19, 0
    %p167 = por %p165, %p166
    %p168 = scmp.ne.s32.totalorder %s157, %s160
    %p169 = scmp.eq.s32.totalorder %s24, 15
    %p170 = por %p168, %p169
    %p171 = scmp.ne.s32.totalorder %s160, %s161
    %p172 = scmp.eq.s32.totalorder %s24, 0
    %p173 = por %p171, %p172
    %p174 = scmp.ne.s32.totalorder %s160, %s161
    %p175 = scmp.eq.s32.totalorder %s25, 15
    %p176 = por %p174, %p175
    %p178 = scmp.ne.s32.totalorder %s161, %s177
    %p179 = scmp.eq.s32.totalorder %s25, 0
    %p180 = por %p178, %p179
    %s181 = sld [smem:[#allocation4 + %s26]]
    %s182 = sld [smem:[#allocation4 + %s38]]
    %s183 = ssub.s32 %s181, %s182
    %p184 = scmp.eq.s32.totalorder %s183, 0
    %s186 = sadd.s32 %s185, 1
    %s187 = scalar_select %p184, %s185, %s186
    %p190 = pneg %p184
    %p191 = scmp.eq.s32.totalorder %s19, 15
    %p192 = por %p190, %p191
    %p193 = scmp.ne.s32.totalorder %s185, %s188
    %p194 = scmp.eq.s32.totalorder %s19, 0
    %p195 = por %p193, %p194
    %p196 = scmp.ne.s32.totalorder %s185, %s188
    %p197 = scmp.eq.s32.totalorder %s24, 15
    %p198 = por %p196, %p197
    %p199 = scmp.ne.s32.totalorder %s188, %s189
    %p200 = scmp.eq.s32.totalorder %s24, 0
    %p201 = por %p199, %p200
    %p202 = scmp.ne.s32.totalorder %s188, %s189
    %p203 = scmp.eq.s32.totalorder %s25, 15
    %p204 = por %p202, %p203
    %p206 = scmp.ne.s32.totalorder %s189, %s205
    %p207 = scmp.eq.s32.totalorder %s25, 0
    %p208 = por %p206, %p207
    %s209 = ssub.s32 %s26, %s38
    %p210 = scmp.eq.s32.totalorder %s209, 0
    %s212 = sadd.s32 %s211, 1
    %s213 = scalar_select %p210, %s211, %s212
    %p216 = pneg %p210
    %p217 = scmp.eq.s32.totalorder %s19, 15
    %p218 = por %p216, %p217
    %p219 = scmp.ne.s32.totalorder %s211, %s214
    %p220 = scmp.eq.s32.totalorder %s19, 0
    %p221 = por %p219, %p220
    %p222 = scmp.ne.s32.totalorder %s211, %s214
    %p223 = scmp.eq.s32.totalorder %s24, 15
    %p224 = por %p222, %p223
    %p225 = scmp.ne.s32.totalorder %s214, %s215
    %p226 = scmp.eq.s32.totalorder %s24, 0
    %p227 = por %p225, %p226
    %p228 = scmp.ne.s32.totalorder %s214, %s215
    %p229 = scmp.eq.s32.totalorder %s25, 15
    %p230 = por %p228, %p229
    %p232 = scmp.ne.s32.totalorder %s215, %s231
    %p233 = scmp.eq.s32.totalorder %s25, 0
    %p234 = por %p232, %p233
    %p235 = scmp.le.s32.totalorder 1, %s19
    %p236 = scmp.lt.s32.totalorder %s19, 17
    %p237 = pnand %p235, %p236
    %p238 = pneg %p237
    // Predicated region
    $region9: #{moe_forward.3} parent=5 // pred_check
      _
    $region10: #{moe_forward.3} parent=5 // pred_check_branch
      %240 = sbr.rel (%p237) target = $region12
    $region11: #{moe_forward.3} parent=5 // pred_region
      %s241 = ssub.s32 %s19, 1
    $region12: #{moe_forward.3} parent=5 // pred_fallthru
      _
    %p242 = scmp.lt.s32.totalorder %s19, 16
    // Predicated region
    $region13: #{moe_forward.3} parent=5 // pred_check
      %p243 = pneg %p242
    $region14: #{moe_forward.3} parent=5 // pred_check_branch
      %245 = sbr.rel (%p243) target = $region16
    $region15: #{moe_forward.3} parent=5 // pred_region
      // Predicated region
      $region17: #{moe_forward.3} parent=15 // pred_check
        %p246 = pneg %p51
      $region18: #{moe_forward.3} parent=15 // pred_check_branch
        %248 = sbr.rel (%p246) target = $region20
      $region19: #{moe_forward.3} parent=15 // pred_region
        %p249 = scmp.lt.s32.totalorder %s26, 15
        %s250 = scalar_select %p249, %s26, 15
        %s251 = smul.addr %s250, 4
        %s252 = scalar_lea.vmem %s1, %s251
      $region20: #{moe_forward.3} parent=15 // pred_fallthru
        _
      // Predicated region
      $region21: #{moe_forward.3} parent=15 // pred_check
        %p253 = pneg %p77
      $region22: #{moe_forward.3} parent=15 // pred_check_branch
        %255 = sbr.rel (%p253) target = $region24
      $region23: #{moe_forward.3} parent=15 // pred_region
        %p256 = scmp.lt.s32.totalorder %s26, 15
        %s257 = scalar_select %p256, %s26, 15
        %s258 = smul.addr %s257, 8
        %s259 = scalar_lea.vmem %s2, %s258
      $region24: #{moe_forward.3} parent=15 // pred_fallthru
        _
      // Predicated region
      $region25: #{moe_forward.3} parent=15 // pred_check
        %p260 = pneg %p107
      $region26: #{moe_forward.3} parent=15 // pred_check_branch
        %262 = sbr.rel (%p260) target = $region28
      $region27: #{moe_forward.3} parent=15 // pred_region
        %s263 = sld [smem:[#allocation4 + %s26]]
        %s264 = smul.u32 4, %s27
        %p265 = scmp.lt.s32.totalorder %s263, 7
        %s266 = scalar_select %p265, %s263, 7
        %p267 = scmp.lt.s32.totalorder %s264, 3
        %s268 = scalar_select %p267, %s264, 3
        %s269 = smul.addr %s266, 64
        %s270 = sadd.s32 %s268, %s269
        %s271 = smul.addr %s270, 4
        %s272 = scalar_lea.vmem %s3, %s271
        %s273 = sld [smem:[#allocation4 + %s26]]
        %s274 = smul.u32 4, %s27
      $region28: #{moe_forward.3} parent=15 // pred_fallthru
        _
      // Predicated region
      $region29: #{moe_forward.3} parent=15 // pred_check
        %p275 = pneg %p137
      $region30: #{moe_forward.3} parent=15 // pred_check_branch
        %277 = sbr.rel (%p275) target = $region32
      $region31: #{moe_forward.3} parent=15 // pred_region
        %s278 = sld [smem:[#allocation4 + %s26]]
        %s279 = smul.u32 4, %s27
        %p280 = scmp.lt.s32.totalorder %s278, 7
        %s281 = scalar_select %p280, %s278, 7
        %p282 = scmp.lt.s32.totalorder %s279, 3
        %s283 = scalar_select %p282, %s279, 3
        %s284 = smul.addr %s281, 4
        %s285 = sadd.s32 %s283, %s284
        %s286 = scalar_lea.vmem %s4, %s285
        %s287 = sld [smem:[#allocation4 + %s26]]
        %s288 = smul.u32 4, %s27
      $region32: #{moe_forward.3} parent=15 // pred_fallthru
        _
      // Predicated region
      $region33: #{moe_forward.3} parent=15 // pred_check
        %p289 = pneg %p167
      $region34: #{moe_forward.3} parent=15 // pred_check_branch
        %291 = sbr.rel (%p289) target = $region36
      $region35: #{moe_forward.3} parent=15 // pred_region
        %s292 = sld [smem:[#allocation4 + %s26]]
        %s293 = smul.u32 64, %s27
        %p294 = scmp.lt.s32.totalorder %s292, 7
        %s295 = scalar_select %p294, %s292, 7
        %p296 = scmp.lt.s32.totalorder %s293, 63
        %s297 = scalar_select %p296, %s293, 63
        %s298 = smul.addr %s295, 64
        %s299 = sadd.s32 %s297, %s298
        %s300 = smul.addr %s299, 4
        %s301 = scalar_lea.vmem %s5, %s300
        %s302 = sld [smem:[#allocation4 + %s26]]
        %s303 = smul.u32 64, %s27
      $region36: #{moe_forward.3} parent=15 // pred_fallthru
        _
      // Predicated region
      $region37: #{moe_forward.3} parent=15 // pred_check
        %p304 = pneg %p195
      $region38: #{moe_forward.3} parent=15 // pred_check_branch
        %306 = sbr.rel (%p304) target = $region40
      $region39: #{moe_forward.3} parent=15 // pred_region
        %s307 = sld [smem:[#allocation4 + %s26]]
        %p308 = scmp.lt.s32.totalorder %s307, 7
        %s309 = scalar_select %p308, %s307, 7
        %s310 = scalar_lea.vmem %s6, %s309
        %s311 = sld [smem:[#allocation4 + %s26]]
      $region40: #{moe_forward.3} parent=15 // pred_fallthru
        _
    $region16: #{moe_forward.3} parent=5 // pred_fallthru
      _
    %p312 = scmp.le.s32.totalorder 1, %s19
    %p313 = scmp.lt.s32.totalorder %s19, 17
    %p314 = pnand %p312, %p313
    %p315 = pneg %p314
    // Predicated region
    $region41: #{moe_forward.3} parent=5 // pred_check
      _
    $region42: #{moe_forward.3} parent=5 // pred_check_branch
      %317 = sbr.rel (%p314) target = $region44
    $region43: #{moe_forward.3} parent=5 // pred_region
      %s318 = ssub.s32 %s19, 1
      %p319 = scmp.lt.s32.totalorder %s28, 15
      %s320 = scalar_select %p319, %s28, 15
      %s321 = smul.addr %s320, 4
      %s322 = scalar_lea.vmem %s1, %s321
      %p323 = pneg %p57
      %p324 = pneg %p54
      %p325 = scmp.lt.s32.totalorder %s28, 15
      %s326 = scalar_select %p325, %s28, 15
      %s327 = smul.addr %s326, 8
      %s328 = scalar_lea.vmem %s2, %s327
      %p329 = pneg %p83
      %p330 = pneg %p80
      %s331 = sld [smem:[#allocation4 + %s28]]
      %s332 = smul.u32 4, %s29
      %p333 = scmp.lt.s32.totalorder %s331, 7
      %s334 = scalar_select %p333, %s331, 7
      %p335 = scmp.lt.s32.totalorder %s332, 3
      %s336 = scalar_select %p335, %s332, 3
      %s337 = smul.addr %s334, 64
      %s338 = sadd.s32 %s336, %s337
      %s339 = smul.addr %s338, 4
      %s340 = scalar_lea.vmem %s3, %s339
      %p341 = pneg %p113
      %p342 = pneg %p110
      %s343 = sld [smem:[#allocation4 + %s28]]
      %s344 = smul.u32 4, %s29
      %p345 = scmp.lt.s32.totalorder %s343, 7
      %s346 = scalar_select %p345, %s343, 7
      %p347 = scmp.lt.s32.totalorder %s344, 3
      %s348 = scalar_select %p347, %s344, 3
      %s349 = smul.addr %s346, 4
      %s350 = sadd.s32 %s348, %s349
      %s351 = scalar_lea.vmem %s4, %s350
      %p352 = pneg %p143
      %p353 = pneg %p140
      %s354 = sld [smem:[#allocation4 + %s28]]
      %s355 = smul.u32 64, %s29
      %p356 = scmp.lt.s32.totalorder %s354, 7
      %s357 = scalar_select %p356, %s354, 7
      %p358 = scmp.lt.s32.totalorder %s355, 63
      %s359 = scalar_select %p358, %s355, 63
      %s360 = smul.addr %s357, 64
      %s361 = sadd.s32 %s359, %s360
      %s362 = smul.addr %s361, 4
      %s363 = scalar_lea.vmem %s5, %s362
      %p364 = pneg %p173
      %p365 = pneg %p170
      %s366 = sld [smem:[#allocation4 + %s28]]
      %p367 = scmp.lt.s32.totalorder %s366, 7
      %s368 = scalar_select %p367, %s366, 7
      %s369 = scalar_lea.vmem %s6, %s368
      %p370 = pneg %p201
      %p371 = pneg %p198
      %p372 = pneg %p227
      %p373 = pneg %p224
      %p374 = scmp.lt.s32.totalorder %s28, 15
      %s375 = scalar_select %p374, %s28, 15
      %s376 = smul.addr %s375, 8
      %s377 = scalar_lea.vmem %s7, %s376
      %p378 = scmp.lt.s32.totalorder %s28, 15
      %s379 = scalar_select %p378, %s28, 15
      %s380 = smul.addr %s379, 4
      %s381 = scalar_lea.vmem %s1, %s380
      %p382 = scmp.lt.s32.totalorder %s28, 15
      %s383 = scalar_select %p382, %s28, 15
      %s384 = smul.addr %s383, 8
      %s385 = scalar_lea.vmem %s2, %s384
      %s386 = sld [smem:[#allocation4 + %s28]]
      %s387 = smul.u32 4, %s29
      %p388 = scmp.lt.s32.totalorder %s386, 7
      %s389 = scalar_select %p388, %s386, 7
      %p390 = scmp.lt.s32.totalorder %s387, 3
      %s391 = scalar_select %p390, %s387, 3
      %s392 = smul.addr %s389, 64
      %s393 = sadd.s32 %s391, %s392
      %s394 = smul.addr %s393, 4
      %s395 = scalar_lea.vmem %s3, %s394
      %s396 = sld [smem:[#allocation4 + %s28]]
      %s397 = smul.u32 4, %s29
      %s398 = sld [smem:[#allocation4 + %s28]]
      %s399 = smul.u32 4, %s29
      %p400 = scmp.lt.s32.totalorder %s398, 7
      %s401 = scalar_select %p400, %s398, 7
      %p402 = scmp.lt.s32.totalorder %s399, 3
      %s403 = scalar_select %p402, %s399, 3
      %s404 = smul.addr %s401, 4
      %s405 = sadd.s32 %s403, %s404
      %s406 = scalar_lea.vmem %s4, %s405
      %s407 = sld [smem:[#allocation4 + %s28]]
      %s408 = smul.u32 4, %s29
      %s409 = sld [smem:[#allocation4 + %s28]]
      %s410 = smul.u32 64, %s29
      %p411 = scmp.lt.s32.totalorder %s409, 7
      %s412 = scalar_select %p411, %s409, 7
      %p413 = scmp.lt.s32.totalorder %s410, 63
      %s414 = scalar_select %p413, %s410, 63
      %s415 = smul.addr %s412, 64
      %s416 = sadd.s32 %s414, %s415
      %s417 = smul.addr %s416, 4
      %s418 = scalar_lea.vmem %s5, %s417
      %s419 = sld [smem:[#allocation4 + %s28]]
      %s420 = smul.u32 64, %s29
      %s421 = sld [smem:[#allocation4 + %s28]]
      %p422 = scmp.lt.s32.totalorder %s421, 7
      %s423 = scalar_select %p422, %s421, 7
      %s424 = scalar_lea.vmem %s6, %s423
      %s425 = sld [smem:[#allocation4 + %s28]]
      %p426 = scmp.lt.s32.totalorder %s28, 15
      %s427 = scalar_select %p426, %s28, 15
      %s428 = smul.addr %s427, 8
      %s429 = scalar_lea.vmem %s7, %s428
      %p431 = scmp.eq.s32.totalorder %s29, 0
      // Predicated region
      $region45: #{moe_forward.3} parent=43 // pred_check
        %p432 = pneg %p431
      $region46: #{moe_forward.3} parent=43 // pred_check_branch
        %434 = sbr.rel (%p432) target = $region48
      $region47: #{moe_forward.3} parent=43 // pred_region
        %435 = vst [vmem:[#allocation2] sm:$0xff] 0.0
      $region48: #{moe_forward.3} parent=43 // pred_fallthru
        _
      %v436 = vld [vmem:[%s381] sm:$0xf]
      %v437 = vld [vmem:[%s395] sm:$0xff]
      %v438 = vld [vmem:[%s395 + $0x8] sm:$0xff]
      %v439 = vld [vmem:[%s395 + $0x10] sm:$0xff]
      %v440 = vld [vmem:[%s395 + $0x18] sm:$0xff]
      %v441 = vld [vmem:[%s395 + $0x20] sm:$0xff]
      %v442 = vld [vmem:[%s395 + $0x28] sm:$0xff]
      %v443 = vld [vmem:[%s395 + $0x30] sm:$0xff]
      %v444 = vld [vmem:[%s395 + $0x38] sm:$0xff]
      %v445 = vld [vmem:[%s395 + $0x40] sm:$0xff]
      %v446 = vld [vmem:[%s395 + $0x48] sm:$0xff]
      %v447 = vld [vmem:[%s395 + $0x50] sm:$0xff]
      %v448 = vld [vmem:[%s395 + $0x58] sm:$0xff]
      %v449 = vld [vmem:[%s395 + $0x60] sm:$0xff]
      %v450 = vld [vmem:[%s395 + $0x68] sm:$0xff]
      %v451 = vld [vmem:[%s395 + $0x70] sm:$0xff]
      %v452 = vld [vmem:[%s395 + $0x78] sm:$0xff]
      %v453 = vld [vmem:[%s395 + $0x80] sm:$0xff]
      %v454 = vld [vmem:[%s395 + $0x88] sm:$0xff]
      %v455 = vld [vmem:[%s395 + $0x90] sm:$0xff]
      %v456 = vld [vmem:[%s395 + $0x98] sm:$0xff]
      %v457 = vld [vmem:[%s395 + $0xa0] sm:$0xff]
      %v458 = vld [vmem:[%s395 + $0xa8] sm:$0xff]
      %v459 = vld [vmem:[%s395 + $0xb0] sm:$0xff]
      %v460 = vld [vmem:[%s395 + $0xb8] sm:$0xff]
      %v461 = vld [vmem:[%s395 + $0xc0] sm:$0xff]
      %v462 = vld [vmem:[%s395 + $0xc8] sm:$0xff]
      %v463 = vld [vmem:[%s395 + $0xd0] sm:$0xff]
      %v464 = vld [vmem:[%s395 + $0xd8] sm:$0xff]
      %v465 = vld [vmem:[%s395 + $0xe0] sm:$0xff]
      %v466 = vld [vmem:[%s395 + $0xe8] sm:$0xff]
      %v467 = vld [vmem:[%s395 + $0xf0] sm:$0xff]
      %v468 = vld [vmem:[%s395 + $0xf8] sm:$0xff]
      %v469 = vld [vmem:[%s406] sm:$0xf]
      %v471 = vlaneseq
      %v472 = vshrl.u32 %v471, 7
      %v473 = vsub.s32 0, %v472
      %v474 = vrot.slane %v469, %v473
      %v475 = vlaneseq
      %v476 = vshrl.u32 %v475, 7
      %v477 = vsub.s32 1, %v476
      %v478 = vrot.slane %v469, %v477
      %v479 = vlaneseq
      %v480 = vshrl.u32 %v479, 7
      %v481 = vsub.s32 2, %v480
      %v482 = vrot.slane %v469, %v481
      %v483 = vlaneseq
      %v484 = vshrl.u32 %v483, 7
      %v485 = vsub.s32 3, %v484
      %v486 = vrot.slane %v469, %v485
      %v523 = vunpack.c.l.b16 %v437
      %v524 = vunpack.c.h.b16 %v437
      %v525 = vunpack.c.l.b16 %v438
      %v526 = vunpack.c.h.b16 %v438
      %v527 = vunpack.c.l.b16 %v439
      %v528 = vunpack.c.h.b16 %v439
      %v529 = vunpack.c.l.b16 %v440
      %v530 = vunpack.c.h.b16 %v440
      %v531 = vunpack.c.l.b16 %v441
      %v532 = vunpack.c.h.b16 %v441
      %v533 = vunpack.c.l.b16 %v442
      %v534 = vunpack.c.h.b16 %v442
      %v535 = vunpack.c.l.b16 %v443
      %v536 = vunpack.c.h.b16 %v443
      %v537 = vunpack.c.l.b16 %v444
      %v538 = vunpack.c.h.b16 %v444
      %v539 = vunpack.c.l.b16 %v445
      %v540 = vunpack.c.h.b16 %v445
      %v541 = vunpack.c.l.b16 %v446
      %v542 = vunpack.c.h.b16 %v446
      %v543 = vunpack.c.l.b16 %v447
      %v544 = vunpack.c.h.b16 %v447
      %v545 = vunpack.c.l.b16 %v448
      %v546 = vunpack.c.h.b16 %v448
      %v547 = vunpack.c.l.b16 %v449
      %v548 = vunpack.c.h.b16 %v449
      %v549 = vunpack.c.l.b16 %v450
      %v550 = vunpack.c.h.b16 %v450
      %v551 = vunpack.c.l.b16 %v451
      %v552 = vunpack.c.h.b16 %v451
      %v553 = vunpack.c.l.b16 %v452
      %v554 = vunpack.c.h.b16 %v452
      %v555 = vunpack.c.l.b16 %v453
      %v556 = vunpack.c.h.b16 %v453
      %v557 = vunpack.c.l.b16 %v454
      %v558 = vunpack.c.h.b16 %v454
      %v559 = vunpack.c.l.b16 %v455
      %v560 = vunpack.c.h.b16 %v455
      %v561 = vunpack.c.l.b16 %v456
      %v562 = vunpack.c.h.b16 %v456
      %v563 = vunpack.c.l.b16 %v457
      %v564 = vunpack.c.h.b16 %v457
      %v565 = vunpack.c.l.b16 %v458
      %v566 = vunpack.c.h.b16 %v458
      %v567 = vunpack.c.l.b16 %v459
      %v568 = vunpack.c.h.b16 %v459
      %v569 = vunpack.c.l.b16 %v460
      %v570 = vunpack.c.h.b16 %v460
      %v571 = vunpack.c.l.b16 %v461
      %v572 = vunpack.c.h.b16 %v461
      %v573 = vunpack.c.l.b16 %v462
      %v574 = vunpack.c.h.b16 %v462
      %v575 = vunpack.c.l.b16 %v463
      %v576 = vunpack.c.h.b16 %v463
      %v577 = vunpack.c.l.b16 %v464
      %v578 = vunpack.c.h.b16 %v464
      %v579 = vunpack.c.l.b16 %v465
      %v580 = vunpack.c.h.b16 %v465
      %v581 = vunpack.c.l.b16 %v466
      %v582 = vunpack.c.h.b16 %v466
      %v583 = vunpack.c.l.b16 %v467
      %v584 = vunpack.c.h.b16 %v467
      %v585 = vunpack.c.l.b16 %v468
      %v586 = vunpack.c.h.b16 %v468
      %v587 = vpack.c.b16 %v527, %v523
      %v588 = vpack.c.b16 %v528, %v524
      %v589 = vpack.c.b16 %v529, %v525
      %v590 = vpack.c.b16 %v530, %v526
      %v591 = vpack.c.b16 %v535, %v531
      %v592 = vpack.c.b16 %v536, %v532
      %v593 = vpack.c.b16 %v537, %v533
      %v594 = vpack.c.b16 %v538, %v534
      %v595 = vpack.c.b16 %v543, %v539
      %v596 = vpack.c.b16 %v544, %v540
      %v597 = vpack.c.b16 %v545, %v541
      %v598 = vpack.c.b16 %v546, %v542
      %v599 = vpack.c.b16 %v551, %v547
      %v600 = vpack.c.b16 %v552, %v548
      %v601 = vpack.c.b16 %v553, %v549
      %v602 = vpack.c.b16 %v554, %v550
      %v603 = vpack.c.b16 %v559, %v555
      %v604 = vpack.c.b16 %v560, %v556
      %v605 = vpack.c.b16 %v561, %v557
      %v606 = vpack.c.b16 %v562, %v558
      %v607 = vpack.c.b16 %v567, %v563
      %v608 = vpack.c.b16 %v568, %v564
      %v609 = vpack.c.b16 %v569, %v565
      %v610 = vpack.c.b16 %v570, %v566
      %v611 = vpack.c.b16 %v575, %v571
      %v612 = vpack.c.b16 %v576, %v572
      %v613 = vpack.c.b16 %v577, %v573
      %v614 = vpack.c.b16 %v578, %v574
      %v615 = vpack.c.b16 %v583, %v579
      %v616 = vpack.c.b16 %v584, %v580
      %v617 = vpack.c.b16 %v585, %v581
      %v618 = vpack.c.b16 %v586, %v582
      %651 = vmatprep.subr.bf16.mxu0 %v588
      %652 = vmatpush1.bf16.msra.mxu0 %v587
      %653 = vmatprep.subr.bf16.mxu0 %v592
      %654 = vmatpush1.bf16.msra.mxu0 %v591
      %655 = vmatprep.subr.bf16.mxu0 %v596
      %656 = vmatpush1.bf16.msra.mxu0 %v595
      %657 = vmatprep.subr.bf16.mxu0 %v600
      %658 = vmatpush1.bf16.msra.mxu0 %v599
      %659 = vmatprep.subr.bf16.mxu0 %v604
      %660 = vmatpush1.bf16.msra.mxu0 %v603
      %661 = vmatprep.subr.bf16.mxu0 %v608
      %662 = vmatpush1.bf16.msra.mxu0 %v607
      %663 = vmatprep.subr.bf16.mxu0 %v612
      %664 = vmatpush1.bf16.msra.mxu0 %v611
      %665 = vmatprep.subr.bf16.mxu0 %v616
      %666 = vmatpush1.bf16.msra.mxu0 %v615
      %667 = vmatprep.subr.bf16.mxu0 0
      %668 = vmatpush1.bf16.msra.mxu0 0
      %669 = vmatprep.subr.bf16.mxu0 0
      %670 = vmatpush1.bf16.msra.mxu0 0
      %671 = vmatprep.subr.bf16.mxu0 0
      %672 = vmatpush1.bf16.msra.mxu0 0
      %673 = vmatprep.subr.bf16.mxu0 0
      %674 = vmatpush1.bf16.msra.mxu0 0
      %675 = vmatprep.subr.bf16.mxu0 0
      %676 = vmatpush1.bf16.msra.mxu0 0
      %677 = vmatprep.subr.bf16.mxu0 0
      %678 = vmatpush1.bf16.msra.mxu0 0
      %679 = vmatprep.subr.bf16.mxu0 0
      %680 = vmatpush1.bf16.msra.mxu0 0
      %681 = vmatprep.subr.bf16.mxu0 0
      %682 = vmatpush1.bf16.msra.mxu0 0
      %683 = vmatprep.mubr.bf16.mxu0 0
      %684 = vmatmul.mubr.bf16.gmra.mrb[0].mxu0 %v436
      %v685 = vpop.f32.mrb[0].mxu0
      %v686 = vadd.f32 %v474, %v685
      %v687 = vpop.f32.mrb[0].mxu0
      %v688 = vadd.f32 %v478, %v687
      %v689 = vpop.f32.mrb[0].mxu0
      %v690 = vpop.f32.mrb[0].mxu0
      %691 = vdwg.mxu0
      %692 = vmatprep.subr.bf16.mxu0 %v590
      %693 = vmatpush1.bf16.msra.mxu0 %v589
      %694 = vmatprep.subr.bf16.mxu0 %v594
      %695 = vmatpush1.bf16.msra.mxu0 %v593
      %696 = vmatprep.subr.bf16.mxu0 %v598
      %697 = vmatpush1.bf16.msra.mxu0 %v597
      %698 = vmatprep.subr.bf16.mxu0 %v602
      %699 = vmatpush1.bf16.msra.mxu0 %v601
      %700 = vmatprep.subr.bf16.mxu0 %v606
      %701 = vmatpush1.bf16.msra.mxu0 %v605
      %702 = vmatprep.subr.bf16.mxu0 %v610
      %703 = vmatpush1.bf16.msra.mxu0 %v609
      %704 = vmatprep.subr.bf16.mxu0 %v614
      %705 = vmatpush1.bf16.msra.mxu0 %v613
      %706 = vmatprep.subr.bf16.mxu0 %v618
      %707 = vmatpush1.bf16.msra.mxu0 %v617
      %708 = vmatprep.subr.bf16.mxu0 0
      %709 = vmatpush1.bf16.msra.mxu0 0
      %710 = vmatprep.subr.bf16.mxu0 0
      %711 = vmatpush1.bf16.msra.mxu0 0
      %712 = vmatprep.subr.bf16.mxu0 0
      %713 = vmatpush1.bf16.msra.mxu0 0
      %714 = vmatprep.subr.bf16.mxu0 0
      %715 = vmatpush1.bf16.msra.mxu0 0
      %716 = vmatprep.subr.bf16.mxu0 0
      %717 = vmatpush1.bf16.msra.mxu0 0
      %718 = vmatprep.subr.bf16.mxu0 0
      %719 = vmatpush1.bf16.msra.mxu0 0
      %720 = vmatprep.subr.bf16.mxu0 0
      %721 = vmatpush1.bf16.msra.mxu0 0
      %722 = vmatprep.subr.bf16.mxu0 0
      %723 = vmatpush1.bf16.msra.mxu0 0
      %724 = vmatprep.mubr.bf16.mxu0 0
      %725 = vmatmul.mubr.bf16.gmra.mrb[0].mxu0 %v436
      %v726 = vpop.f32.mrb[0].mxu0
      %v727 = vadd.f32 %v482, %v726
      %v728 = vpop.f32.mrb[0].mxu0
      %v729 = vadd.f32 %v486, %v728
      %v730 = vpop.f32.mrb[0].mxu0
      %v731 = vpop.f32.mrb[0].mxu0
      %732 = vdwg.mxu0
      %v733 = vmax.f32 %v686, 0.0
      %v734 = vmax.f32 %v688, 0.0
      %v735 = vmax.f32 %v727, 0.0
      %v736 = vmax.f32 %v729, 0.0
      %v737 = vpack.c.bf16 %v733, %v733
      %v738 = vpack.c.bf16 %v734, %v734
      %v739 = vpack.c.bf16 %v735, %v735
      %v740 = vpack.c.bf16 %v736, %v736
      %v741 = vld [vmem:[#allocation2] sm:$0xff]
      %v742 = vld [vmem:[%s418] sm:$0xf]
      %v743 = vld [vmem:[%s418 + $0x4] sm:$0xf]
      %v744 = vld [vmem:[%s418 + $0x8] sm:$0xf]
      %v745 = vld [vmem:[%s418 + $0xc] sm:$0xf]
      %v746 = vld [vmem:[%s418 + $0x10] sm:$0xf]
      %v747 = vld [vmem:[%s418 + $0x14] sm:$0xf]
      %v748 = vld [vmem:[%s418 + $0x18] sm:$0xf]
      %v749 = vld [vmem:[%s418 + $0x1c] sm:$0xf]
      %v750 = vld [vmem:[%s418 + $0x20] sm:$0xf]
      %v751 = vld [vmem:[%s418 + $0x24] sm:$0xf]
      %v752 = vld [vmem:[%s418 + $0x28] sm:$0xf]
      %v753 = vld [vmem:[%s418 + $0x2c] sm:$0xf]
      %v754 = vld [vmem:[%s418 + $0x30] sm:$0xf]
      %v755 = vld [vmem:[%s418 + $0x34] sm:$0xf]
      %v756 = vld [vmem:[%s418 + $0x38] sm:$0xf]
      %v757 = vld [vmem:[%s418 + $0x3c] sm:$0xf]
      %v758 = vld [vmem:[%s418 + $0x40] sm:$0xf]
      %v759 = vld [vmem:[%s418 + $0x44] sm:$0xf]
      %v760 = vld [vmem:[%s418 + $0x48] sm:$0xf]
      %v761 = vld [vmem:[%s418 + $0x4c] sm:$0xf]
      %v762 = vld [vmem:[%s418 + $0x50] sm:$0xf]
      %v763 = vld [vmem:[%s418 + $0x54] sm:$0xf]
      %v764 = vld [vmem:[%s418 + $0x58] sm:$0xf]
      %v765 = vld [vmem:[%s418 + $0x5c] sm:$0xf]
      %v766 = vld [vmem:[%s418 + $0x60] sm:$0xf]
      %v767 = vld [vmem:[%s418 + $0x64] sm:$0xf]
      %v768 = vld [vmem:[%s418 + $0x68] sm:$0xf]
      %v769 = vld [vmem:[%s418 + $0x6c] sm:$0xf]
      %v770 = vld [vmem:[%s418 + $0x70] sm:$0xf]
      %v771 = vld [vmem:[%s418 + $0x74] sm:$0xf]
      %v772 = vld [vmem:[%s418 + $0x78] sm:$0xf]
      %v773 = vld [vmem:[%s418 + $0x7c] sm:$0xf]
      %v774 = vld [vmem:[%s418 + $0x80] sm:$0xf]
      %v775 = vld [vmem:[%s418 + $0x84] sm:$0xf]
      %v776 = vld [vmem:[%s418 + $0x88] sm:$0xf]
      %v777 = vld [vmem:[%s418 + $0x8c] sm:$0xf]
      %v778 = vld [vmem:[%s418 + $0x90] sm:$0xf]
      %v779 = vld [vmem:[%s418 + $0x94] sm:$0xf]
      %v780 = vld [vmem:[%s418 + $0x98] sm:$0xf]
      %v781 = vld [vmem:[%s418 + $0x9c] sm:$0xf]
      %v782 = vld [vmem:[%s418 + $0xa0] sm:$0xf]
      %v783 = vld [vmem:[%s418 + $0xa4] sm:$0xf]
      %v784 = vld [vmem:[%s418 + $0xa8] sm:$0xf]
      %v785 = vld [vmem:[%s418 + $0xac] sm:$0xf]
      %v786 = vld [vmem:[%s418 + $0xb0] sm:$0xf]
      %v787 = vld [vmem:[%s418 + $0xb4] sm:$0xf]
      %v788 = vld [vmem:[%s418 + $0xb8] sm:$0xf]
      %v789 = vld [vmem:[%s418 + $0xbc] sm:$0xf]
      %v790 = vld [vmem:[%s418 + $0xc0] sm:$0xf]
      %v791 = vld [vmem:[%s418 + $0xc4] sm:$0xf]
      %v792 = vld [vmem:[%s418 + $0xc8] sm:$0xf]
      %v793 = vld [vmem:[%s418 + $0xcc] sm:$0xf]
      %v794 = vld [vmem:[%s418 + $0xd0] sm:$0xf]
      %v795 = vld [vmem:[%s418 + $0xd4] sm:$0xf]
      %v796 = vld [vmem:[%s418 + $0xd8] sm:$0xf]
      %v797 = vld [vmem:[%s418 + $0xdc] sm:$0xf]
      %v798 = vld [vmem:[%s418 + $0xe0] sm:$0xf]
      %v799 = vld [vmem:[%s418 + $0xe4] sm:$0xf]
      %v800 = vld [vmem:[%s418 + $0xe8] sm:$0xf]
      %v801 = vld [vmem:[%s418 + $0xec] sm:$0xf]
      %v802 = vld [vmem:[%s418 + $0xf0] sm:$0xf]
      %v803 = vld [vmem:[%s418 + $0xf4] sm:$0xf]
      %v804 = vld [vmem:[%s418 + $0xf8] sm:$0xf]
      %v805 = vld [vmem:[%s418 + $0xfc] sm:$0xf]
      %v870 = vunpack.c.l.b16 %v742
      %v871 = vunpack.c.l.b16 %v743
      %v872 = vunpack.c.l.b16 %v744
      %v873 = vunpack.c.l.b16 %v745
      %v874 = vunpack.c.l.b16 %v746
      %v875 = vunpack.c.l.b16 %v747
      %v876 = vunpack.c.l.b16 %v748
      %v877 = vunpack.c.l.b16 %v749
      %v878 = vunpack.c.l.b16 %v750
      %v879 = vunpack.c.l.b16 %v751
      %v880 = vunpack.c.l.b16 %v752
      %v881 = vunpack.c.l.b16 %v753
      %v882 = vunpack.c.l.b16 %v754
      %v883 = vunpack.c.l.b16 %v755
      %v884 = vunpack.c.l.b16 %v756
      %v885 = vunpack.c.l.b16 %v757
      %v886 = vunpack.c.l.b16 %v758
      %v887 = vunpack.c.l.b16 %v759
      %v888 = vunpack.c.l.b16 %v760
      %v889 = vunpack.c.l.b16 %v761
      %v890 = vunpack.c.l.b16 %v762
      %v891 = vunpack.c.l.b16 %v763
      %v892 = vunpack.c.l.b16 %v764
      %v893 = vunpack.c.l.b16 %v765
      %v894 = vunpack.c.l.b16 %v766
      %v895 = vunpack.c.l.b16 %v767
      %v896 = vunpack.c.l.b16 %v768
      %v897 = vunpack.c.l.b16 %v769
      %v898 = vunpack.c.l.b16 %v770
      %v899 = vunpack.c.l.b16 %v771
      %v900 = vunpack.c.l.b16 %v772
      %v901 = vunpack.c.l.b16 %v773
      %v902 = vunpack.c.l.b16 %v774
      %v903 = vunpack.c.l.b16 %v775
      %v904 = vunpack.c.l.b16 %v776
      %v905 = vunpack.c.l.b16 %v777
      %v906 = vunpack.c.l.b16 %v778
      %v907 = vunpack.c.l.b16 %v779
      %v908 = vunpack.c.l.b16 %v780
      %v909 = vunpack.c.l.b16 %v781
      %v910 = vunpack.c.l.b16 %v782
      %v911 = vunpack.c.l.b16 %v783
      %v912 = vunpack.c.l.b16 %v784
      %v913 = vunpack.c.l.b16 %v785
      %v914 = vunpack.c.l.b16 %v786
      %v915 = vunpack.c.l.b16 %v787
      %v916 = vunpack.c.l.b16 %v788
      %v917 = vunpack.c.l.b16 %v789
      %v918 = vunpack.c.l.b16 %v790
      %v919 = vunpack.c.l.b16 %v791
      %v920 = vunpack.c.l.b16 %v792
      %v921 = vunpack.c.l.b16 %v793
      %v922 = vunpack.c.l.b16 %v794
      %v923 = vunpack.c.l.b16 %v795
      %v924 = vunpack.c.l.b16 %v796
      %v925 = vunpack.c.l.b16 %v797
      %v926 = vunpack.c.l.b16 %v798
      %v927 = vunpack.c.l.b16 %v799
      %v928 = vunpack.c.l.b16 %v800
      %v929 = vunpack.c.l.b16 %v801
      %v930 = vunpack.c.l.b16 %v802
      %v931 = vunpack.c.l.b16 %v803
      %v932 = vunpack.c.l.b16 %v804
      %v933 = vunpack.c.l.b16 %v805
      %v934 = vpack.c.b16 %v871, %v870
      %v935 = vpack.c.b16 %v873, %v872
      %v936 = vpack.c.b16 %v875, %v874
      %v937 = vpack.c.b16 %v877, %v876
      %v938 = vpack.c.b16 %v879, %v878
      %v939 = vpack.c.b16 %v881, %v880
      %v940 = vpack.c.b16 %v883, %v882
      %v941 = vpack.c.b16 %v885, %v884
      %v942 = vpack.c.b16 %v887, %v886
      %v943 = vpack.c.b16 %v889, %v888
      %v944 = vpack.c.b16 %v891, %v890
      %v945 = vpack.c.b16 %v893, %v892
      %v946 = vpack.c.b16 %v895, %v894
      %v947 = vpack.c.b16 %v897, %v896
      %v948 = vpack.c.b16 %v899, %v898
      %v949 = vpack.c.b16 %v901, %v900
      %v950 = vpack.c.b16 %v903, %v902
      %v951 = vpack.c.b16 %v905, %v904
      %v952 = vpack.c.b16 %v907, %v906
      %v953 = vpack.c.b16 %v909, %v908
      %v954 = vpack.c.b16 %v911, %v910
      %v955 = vpack.c.b16 %v913, %v912
      %v956 = vpack.c.b16 %v915, %v914
      %v957 = vpack.c.b16 %v917, %v916
      %v958 = vpack.c.b16 %v919, %v918
      %v959 = vpack.c.b16 %v921, %v920
      %v960 = vpack.c.b16 %v923, %v922
      %v961 = vpack.c.b16 %v925, %v924
      %v962 = vpack.c.b16 %v927, %v926
      %v963 = vpack.c.b16 %v929, %v928
      %v964 = vpack.c.b16 %v931, %v930
      %v965 = vpack.c.b16 %v933, %v932
      %998 = vmatprep.subr.bf16.mxu0 0
      %999 = vmatpush1.bf16.msra.mxu0 %v934
      %1000 = vmatprep.subr.bf16.mxu0 0
      %1001 = vmatpush1.bf16.msra.mxu0 %v935
      %1002 = vmatprep.subr.bf16.mxu0 0
      %1003 = vmatpush1.bf16.msra.mxu0 %v936
      %1004 = vmatprep.subr.bf16.mxu0 0
      %1005 = vmatpush1.bf16.msra.mxu0 %v937
      %1006 = vmatprep.subr.bf16.mxu0 0
      %1007 = vmatpush1.bf16.msra.mxu0 %v938
      %1008 = vmatprep.subr.bf16.mxu0 0
      %1009 = vmatpush1.bf16.msra.mxu0 %v939
      %1010 = vmatprep.subr.bf16.mxu0 0
      %1011 = vmatpush1.bf16.msra.mxu0 %v940
      %1012 = vmatprep.subr.bf16.mxu0 0
      %1013 = vmatpush1.bf16.msra.mxu0 %v941
      %1014 = vmatprep.subr.bf16.mxu0 0
      %1015 = vmatpush1.bf16.msra.mxu0 %v942
      %1016 = vmatprep.subr.bf16.mxu0 0
      %1017 = vmatpush1.bf16.msra.mxu0 %v943
      %1018 = vmatprep.subr.bf16.mxu0 0
      %1019 = vmatpush1.bf16.msra.mxu0 %v944
      %1020 = vmatprep.subr.bf16.mxu0 0
      %1021 = vmatpush1.bf16.msra.mxu0 %v945
      %1022 = vmatprep.subr.bf16.mxu0 0
      %1023 = vmatpush1.bf16.msra.mxu0 %v946
      %1024 = vmatprep.subr.bf16.mxu0 0
      %1025 = vmatpush1.bf16.msra.mxu0 %v947
      %1026 = vmatprep.subr.bf16.mxu0 0
      %1027 = vmatpush1.bf16.msra.mxu0 %v948
      %1028 = vmatprep.subr.bf16.mxu0 0
      %1029 = vmatpush1.bf16.msra.mxu0 %v949
      %1030 = vmatprep.mubr.bf16.mxu0 %v738
      %1031 = vmatmul.mubr.bf16.gmra.mrb[0].mxu0 %v737
      %v1032 = vpop.f32.mrb[0].mxu0
      %v1033 = vadd.f32 0.0, %v1032
      %v1034 = vpop.f32.mrb[0].mxu0
      %v1035 = vpop.f32.mrb[0].mxu0
      %v1036 = vpop.f32.mrb[0].mxu0
      %1037 = vdwg.mxu0
      %1038 = vmatprep.subr.bf16.mxu0 0
      %1039 = vmatpush1.bf16.msra.mxu0 %v950
      %1040 = vmatprep.subr.bf16.mxu0 0
      %1041 = vmatpush1.bf16.msra.mxu0 %v951
      %1042 = vmatprep.subr.bf16.mxu0 0
      %1043 = vmatpush1.bf16.msra.mxu0 %v952
      %1044 = vmatprep.subr.bf16.mxu0 0
      %1045 = vmatpush1.bf16.msra.mxu0 %v953
      %1046 = vmatprep.subr.bf16.mxu0 0
      %1047 = vmatpush1.bf16.msra.mxu0 %v954
      %1048 = vmatprep.subr.bf16.mxu0 0
      %1049 = vmatpush1.bf16.msra.mxu0 %v955
      %1050 = vmatprep.subr.bf16.mxu0 0
      %1051 = vmatpush1.bf16.msra.mxu0 %v956
      %1052 = vmatprep.subr.bf16.mxu0 0
      %1053 = vmatpush1.bf16.msra.mxu0 %v957
      %1054 = vmatprep.subr.bf16.mxu0 0
      %1055 = vmatpush1.bf16.msra.mxu0 %v958
      %1056 = vmatprep.subr.bf16.mxu0 0
      %1057 = vmatpush1.bf16.msra.mxu0 %v959
      %1058 = vmatprep.subr.bf16.mxu0 0
      %1059 = vmatpush1.bf16.msra.mxu0 %v960
      %1060 = vmatprep.subr.bf16.mxu0 0
      %1061 = vmatpush1.bf16.msra.mxu0 %v961
      %1062 = vmatprep.subr.bf16.mxu0 0
      %1063 = vmatpush1.bf16.msra.mxu0 %v962
      %1064 = vmatprep.subr.bf16.mxu0 0
      %1065 = vmatpush1.bf16.msra.mxu0 %v963
      %1066 = vmatprep.subr.bf16.mxu0 0
      %1067 = vmatpush1.bf16.msra.mxu0 %v964
      %1068 = vmatprep.subr.bf16.mxu0 0
      %1069 = vmatpush1.bf16.msra.mxu0 %v965
      %1070 = vmatprep.mubr.bf16.mxu0 %v740
      %1071 = vmatmul.mubr.bf16.gmra.mrb[0].mxu0 %v739
      %v1072 = vpop.f32.mrb[0].mxu0
      %v1073 = vadd.f32 %v1033, %v1072
      %v1074 = vpop.f32.mrb[0].mxu0
      %v1075 = vpop.f32.mrb[0].mxu0
      %v1076 = vpop.f32.mrb[0].mxu0
      %1077 = vdwg.mxu0
      %v1078 = vadd.f32 %v741, %v1073
      %1079 = vst [vmem:[#allocation2] sm:$0xff] %v1078
      // Predicated region
      $region49: #{moe_forward.3} parent=43 // pred_check
        %p1080 = pneg %p431
      $region50: #{moe_forward.3} parent=43 // pred_check_branch
        %1082 = sbr.rel (%p1080) target = $region52
      $region51: #{moe_forward.3} parent=43 // pred_region
        %v1083 = vld [vmem:[%s385] sm:$0xff]
        %v1084 = vld [vmem:[#allocation2] sm:$0xff]
        %v1085 = vld [vmem:[%s424] sm:$0x1]
        %v1087 = vlaneseq
        %v1088 = vshrl.u32 %v1087, 7
        %v1089 = vsub.s32 0, %v1088
        %v1090 = vrot.slane %v1085, %v1089
        %v1092 = vadd.f32 %v1084, %v1090
        %1094 = vset.pattern.permute.xlu0 0
        %1095 = vperm.xlu0 %1094, %v1083
        %v1096 = vpop.permute.xlu0 %1095
        %v1098 = vmul.f32 %v1096, %v1092
        %1099 = vst [vmem:[%s429] sm:$0xff] %v1098
      $region52: #{moe_forward.3} parent=43 // pred_fallthru
        _
      %p1100 = scmp.lt.s32.totalorder %s28, 15
      %s1101 = scalar_select %p1100, %s28, 15
      %s1102 = smul.addr %s1101, 8
      %s1103 = scalar_lea.vmem %s7, %s1102
      // Predicated region
      $region53: #{moe_forward.3} parent=43 // pred_check
        %p1104 = pneg %p224
      $region54: #{moe_forward.3} parent=43 // pred_check_branch
        %1106 = sbr.rel (%p1104) target = $region56
      $region55: #{moe_forward.3} parent=43 // pred_region
        _
      $region56: #{moe_forward.3} parent=43 // pred_fallthru
        _
    $region44: #{moe_forward.3} parent=5 // pred_fallthru
      _
    %p1107 = scmp.le.s32.totalorder 2, %s19
    // Predicated region
    $region57: #{moe_forward.3} parent=5 // pred_check
      %p1108 = pneg %p1107
    $region58: #{moe_forward.3} parent=5 // pred_check_branch
      %1110 = sbr.rel (%p1108) target = $region60
    $region59: #{moe_forward.3} parent=5 // pred_region
      %s1111 = ssub.s32 %s19, 2
      // Predicated region
      $region61: #{moe_forward.3} parent=59 // pred_check
        %p1112 = pneg %p230
      $region62: #{moe_forward.3} parent=59 // pred_check_branch
        %1114 = sbr.rel (%p1112) target = $region64
      $region63: #{moe_forward.3} parent=59 // pred_region
        %p1115 = scmp.lt.s32.totalorder %s30, 15
        %s1116 = scalar_select %p1115, %s30, 15
        %s1117 = smul.addr %s1116, 8
        %s1118 = scalar_lea.vmem %s7, %s1117
      $region64: #{moe_forward.3} parent=59 // pred_fallthru
        _
    $region60: #{moe_forward.3} parent=5 // pred_fallthru
      _
  $region6: #{moe_forward.3} parent=0 // loop_footer
    %s23 = sadd.s32 1, %s19
  $region7: #{moe_forward.3} parent=0 // loop_footer_branch
    %18 = sbr.rel target = $region3
  $region8: #{moe_forward.3} parent=0 // loop_exit
    _

</llo_original>
